<compile_context>
chip_gen: v5e
topology: v5e:2x2
jax: 0.10.0
libtpu: 0.0.40
codegen_flags: <defaults>
</compile_context>

<pallas_src>
import jax
import jax.numpy as jnp
import numpy as np
from jax.experimental import pallas as pl
from jax.experimental.pallas import tpu as pltpu


# ---------------------------------------------------------------------------
# Fused kernel: attention + weighted context + GRU cell + V-tiled output linear
# Grid: (batch_tile i  [parallel],  vocab_tile j  [arbitrary, inner])
# ---------------------------------------------------------------------------
def decoder_step_kernel(
    emb_ref,     # [TB, E]     f32  embedded tokens (dropout == identity)
    hid_ref,     # [TB, H]     f32  previous hidden state
    enc_ref,     # [TB, S, 2H] f32  encoder outputs (pre-permuted, hoisted)
    encp_ref,    # [TB, S, H]  f32  enc @ W_ae^T (pre-projected once per sequence)
    wah_ref,     # [H, H]      bf16 attention weight (hidden part), transposed
    ba_ref,      # [1, H]      f32  attention bias
    v_ref,       # [1, H]      f32  attention scoring vector
    wie_g_ref,   # [3, E, H]   bf16 GRU W_ih (emb part), per-gate (r,z,n), transposed
    wiw_g_ref,   # [3, 2H, H]  bf16 GRU W_ih (weighted-context part)
    bih_g_ref,   # [3, 1, H]   f32
    whh_g_ref,   # [3, H, H]   bf16 GRU W_hh
    bhh_g_ref,   # [3, 1, H]   f32
    wfh_ref,     # [H, TV]     bf16 fc_out (h_new part), V-tiled
    wfw_ref,     # [2H, TV]    bf16 fc_out (weighted part), V-tiled
    wfe_ref,     # [E, TV]     bf16 fc_out (emb part), V-tiled
    bfc_ref,     # [1, TV]     f32
    pred_ref,    # [TB, TV]    f32 out
    hnew_ref,    # [TB, H]     f32 out (aliased with hid input buffer)
    weighted_sc,  # [TB, 2H]   f32 VMEM scratch (resident across vocab tiles)
    hnew_sc,      # [TB, H]    f32 VMEM scratch
):
    j = pl.program_id(1)          # vocab-tile index (inner axis)
    nv = pl.num_programs(1)

    # ---- attention + context + GRU: compute once per batch tile -------------
    @pl.when(j == 0)
    def _attn_and_gru():
        emb = emb_ref[...]
        hid = hid_ref[...]
        enc = enc_ref[...]
        encp = encp_ref[...]

        hid_b = hid.astype(jnp.bfloat16)

        # energy = tanh(enc_proj + hid @ W_ah^T + b)
        h_part = (jnp.dot(hid_b, wah_ref[...],
                          preferred_element_type=jnp.float32)
                  + ba_ref[...])                                    # [TB, H]
        energy = jnp.tanh(encp + h_part[:, None, :])                # [TB, S, H]
        score = jnp.sum(energy * v_ref[...], axis=-1)               # [TB, S]

        # softmax over source positions (lane axis); EUP approx reciprocal
        m = jnp.max(score, axis=-1, keepdims=True)
        ex = jnp.exp(score - m)
        denom = jnp.sum(ex, axis=-1, keepdims=True)
        attn = ex * pl.reciprocal(denom, approx=True)               # [TB, S]

        # context: VPU broadcast-mul + sublane (XLU) reduce -> MXU stays free
        weighted = jnp.sum(attn[:, :, None] * enc, axis=1)          # [TB, 2H]
        weighted_sc[...] = weighted

        emb_b = emb.astype(jnp.bfloat16)
        wgt_b = weighted.astype(jnp.bfloat16)

        # GRU cell, PyTorch gate order (r, z, n); per-gate lane-aligned matmuls
        def gates(g):
            gx = (jnp.dot(emb_b, wie_g_ref[g],
                          preferred_element_type=jnp.float32)
                  + jnp.dot(wgt_b, wiw_g_ref[g],
                            preferred_element_type=jnp.float32)
                  + bih_g_ref[g])
            gh = (jnp.dot(hid_b, whh_g_ref[g],
                          preferred_element_type=jnp.float32)
                  + bhh_g_ref[g])
            return gx, gh

        gx_r, gh_r = gates(0)
        gx_z, gh_z = gates(1)
        gx_n, gh_n = gates(2)
        r = jax.nn.sigmoid(gx_r + gh_r)
        z = jax.nn.sigmoid(gx_z + gh_z)
        n = jnp.tanh(gx_n + r * gh_n)
        hnew_sc[...] = (1.0 - z) * n + z * hid                      # [TB, H]

    # ---- fc_out([h_new; weighted; emb]) for this vocab tile -----------------
    pred_ref[...] = (
        jnp.dot(hnew_sc[...].astype(jnp.bfloat16), wfh_ref[...],
                preferred_element_type=jnp.float32)
        + jnp.dot(weighted_sc[...].astype(jnp.bfloat16), wfw_ref[...],
                  preferred_element_type=jnp.float32)
        + jnp.dot(emb_ref[...].astype(jnp.bfloat16), wfe_ref[...],
                  preferred_element_type=jnp.float32)
        + bfc_ref[...])                                             # [TB, TV]

    # flush the new hidden state once per batch tile (resident across vocab axis)
    @pl.when(j == nv - 1)
    def _write_hidden():
        hnew_ref[...] = hnew_sc[...]


# ---------------------------------------------------------------------------
# One-time parameter preparation (hoisted out of the per-step decode path)
# ---------------------------------------------------------------------------
def prepare_decoder_params(params, weight_dtype=jnp.bfloat16):
    H = params["W_hh"].shape[1]
    E = params["emb_table"].shape[1]
    W_attn = params["W_attn"]        # [H, 3H]   Linear(3H -> H); cols [0:H]=hid, [H:3H]=enc
    W_ih = params["W_ih"]            # [3H, E+2H]
    W_hh = params["W_hh"]            # [3H, H]
    W_fc = params["W_fc"]            # [V, 3H+E]; cols [0:H]=h_new, [H:3H]=weighted, [3H:]=emb

    def split_gates(w_t):            # [in, 3H] -> [3, in, H]  (gate order r, z, n)
        in_dim = w_t.shape[0]
        return jnp.transpose(w_t.reshape(in_dim, 3, H), (1, 0, 2))

    return dict(
        emb_table=params["emb_table"],
        # attention
        wah_T=jnp.transpose(W_attn[:, :H]).astype(weight_dtype),   # [H, H]
        wae_T=jnp.transpose(W_attn[:, H:]),                        # [2H, H] f32 (used once/seq)
        b_attn=params["b_attn"].reshape(1, -1),                    # [1, H]
        v=params["v"].reshape(1, -1),                              # [1, H]
        # GRU, per-gate stacked -> no non-aligned lane slicing in the kernel
        wie_g=split_gates(jnp.transpose(W_ih[:, :E])).astype(weight_dtype),   # [3, E, H]
        wiw_g=split_gates(jnp.transpose(W_ih[:, E:])).astype(weight_dtype),   # [3, 2H, H]
        whh_g=split_gates(jnp.transpose(W_hh)).astype(weight_dtype),          # [3, H, H]
        b_ih_g=params["b_ih"].reshape(3, 1, H),                               # [3, 1, H]
        b_hh_g=params["b_hh"].reshape(3, 1, H),                               # [3, 1, H]
        # fc_out, split along the concat boundaries, transposed, bf16 (V-streamed)
        wfh_T=jnp.transpose(W_fc[:, :H]).astype(weight_dtype),        # [H, V]
        wfw_T=jnp.transpose(W_fc[:, H:3 * H]).astype(weight_dtype),   # [2H, V]
        wfe_T=jnp.transpose(W_fc[:, 3 * H:]).astype(weight_dtype),    # [E, V]
        b_fc=params["b_fc"].reshape(1, -1),                           # [1, V]
    )


# ---------------------------------------------------------------------------
# Once-per-source-sequence preparation (hoisted out of the per-step path):
# encoder permute + enc @ W_ae^T projection do not change across decode steps.
# ---------------------------------------------------------------------------
def prepare_encoder_state(outputs, prepped):
    """outputs: [S, B, 2H] -> (enc [B, S, 2H], enc_proj [B, S, H])."""
    enc = jnp.transpose(outputs, (1, 0, 2))
    B, S, twoH = enc.shape
    enc_proj = (enc.reshape(B * S, twoH) @ prepped["wae_T"]).reshape(B, S, -1)
    return enc, enc_proj


# ---------------------------------------------------------------------------
# Tile-size / VMEM heuristics
# ---------------------------------------------------------------------------
def _pick_batch_tile(B, max_tb=256):
    """Largest batch tile (multiple of 8, <=256) dividing B; whole batch if it fits."""
    if B <= max_tb:
        return B
    for tb in range(max_tb, 7, -8):
        if B % tb == 0:
            return tb
    return B  # fallback: single (large) tile


def _pick_vocab_tile(V):
    for tv in (1024, 512, 256, 128):
        if V % tv == 0:
            return tv
    return V  # non-128-multiple vocab: single masked tile (pad V for best perf)


def _vmem_limit_bytes():
    # ~75% of physical VMEM, capped at 100 MiB: ~96 MiB on v5e/v6e, ~48 MiB on v7x.
    try:
        cap = pltpu.get_tpu_info().vmem_capacity_bytes
        return min(100 * 1024 * 1024, int(cap * 3 // 4))
    except Exception:
        return 48 * 1024 * 1024


# ---------------------------------------------------------------------------
# Wrapper: layout glue + pallas_call (per decode step)
# ---------------------------------------------------------------------------
def decoder_forward(input_ids, enc, enc_proj, hidden, prepped, *, tv=None):
    """input_ids: [B] int32; enc: [B,S,2H]; enc_proj: [B,S,H]; hidden: [B,H] f32."""
    B, S, twoH = enc.shape
    H = hidden.shape[1]
    assert twoH == 2 * H
    E = prepped["emb_table"].shape[1]
    V = prepped["wfh_T"].shape[1]

    # embedding gather + (identity) dropout stays in JAX glue
    emb = prepped["emb_table"][input_ids]                      # [B, E] f32

    TB = _pick_batch_tile(B)
    NB = B // TB
    TV = tv if tv is not None else _pick_vocab_tile(V)
    if V % TV != 0:
        TV = V
    NV = V // TV
    # NOTE: with NB > 1 the fc weight tiles re-stream per batch tile; for very
    # large batches swap the nest (V outer) or split the fc matmul into its own call.

    grid_spec = pltpu.PrefetchScalarGridSpec(
        num_scalar_prefetch=0,
        grid=(NB, NV),                                  # batch outer, vocab inner
        in_specs=[
            pl.BlockSpec((TB, E), lambda i, j: (i, 0)),            # emb
            pl.BlockSpec((TB, H), lambda i, j: (i, 0)),            # hidden
            pl.BlockSpec((TB, S, twoH), lambda i, j: (i, 0, 0)),   # enc
            pl.BlockSpec((TB, S, H), lambda i, j: (i, 0, 0)),      # enc_proj
            pl.BlockSpec((H, H), lambda i, j: (0, 0)),             # wah_T
            pl.BlockSpec((1, H), lambda i, j: (0, 0)),             # b_attn
            pl.BlockSpec((1, H), lambda i, j: (0, 0)),             # v
            pl.BlockSpec((3, E, H), lambda i, j: (0, 0, 0)),       # wie_g
            pl.BlockSpec((3, twoH, H), lambda i, j: (0, 0, 0)),    # wiw_g
            pl.BlockSpec((3, 1, H), lambda i, j: (0, 0, 0)),       # b_ih_g
            pl.BlockSpec((3, H, H), lambda i, j: (0, 0, 0)),       # whh_g
            pl.BlockSpec((3, 1, H), lambda i, j: (0, 0, 0)),       # b_hh_g
            pl.BlockSpec((H, TV), lambda i, j: (0, j)),            # wfh_T (V-tiled)
            pl.BlockSpec((twoH, TV), lambda i, j: (0, j)),         # wfw_T (V-tiled)
            pl.BlockSpec((E, TV), lambda i, j: (0, j)),            # wfe_T (V-tiled)
            pl.BlockSpec((1, TV), lambda i, j: (0, j)),            # b_fc  (V-tiled)
        ],
        out_specs=[
            pl.BlockSpec((TB, TV), lambda i, j: (i, j)),           # prediction (lane-dense)
            pl.BlockSpec((TB, H), lambda i, j: (i, 0)),            # new hidden (resident over j)
        ],
        scratch_shapes=[
            pltpu.VMEM((TB, twoH), jnp.float32),                   # weighted context
            pltpu.VMEM((TB, H), jnp.float32),                      # h_new
        ],
    )

    pred, h_new = pl.pallas_call(
        decoder_step_kernel,
        out_shape=(
            jax.ShapeDtypeStruct((B, V), jnp.float32),
            jax.ShapeDtypeStruct((B, H), jnp.float32),
        ),
        grid_spec=grid_spec,
        compiler_params=pltpu.CompilerParams(
            dimension_semantics=("parallel", "arbitrary"),
            vmem_limit_bytes=_vmem_limit_bytes(),
        ),
        input_output_aliases={1: 1},   # hidden input buffer <-> h_new output
    )(
        emb, hidden, enc, enc_proj,
        prepped["wah_T"], prepped["b_attn"], prepped["v"],
        prepped["wie_g"], prepped["wiw_g"], prepped["b_ih_g"],
        prepped["whh_g"], prepped["b_hh_g"],
        prepped["wfh_T"], prepped["wfw_T"], prepped["wfe_T"], prepped["b_fc"],
    )
    return pred, h_new


# ---------------------------------------------------------------------------
# Pure-JAX reference (mirrors the PyTorch forward) for correctness checking
# ---------------------------------------------------------------------------
def decoder_reference(input_ids, outputs, hidden, params):
    S, B, twoH = outputs.shape
    H = hidden.shape[1]
    emb = params["emb_table"][input_ids]                              # [B, E]
    hidden_rep = jnp.repeat(hidden[:, None, :], S, axis=1)            # [B, S, H]
    enc = jnp.transpose(outputs, (1, 0, 2))                           # [B, S, 2H]
    cat = jnp.concatenate([hidden_rep, enc], axis=2)                  # [B, S, 3H]
    energy = jnp.tanh(cat @ params["W_attn"].T + params["b_attn"])    # [B, S, H]
    score = jnp.squeeze(energy @ params["v"].T, axis=2)               # [B, S]
    a = jax.nn.softmax(score, axis=1)
    weighted = jnp.einsum("bs,bsk->bk", a, enc)                       # [B, 2H]
    x = jnp.concatenate([emb, weighted], axis=1)
    gx = x @ params["W_ih"].T + params["b_ih"]
    gh = hidden @ params["W_hh"].T + params["b_hh"]
    r = jax.nn.sigmoid(gx[:, :H] + gh[:, :H])
    z = jax.nn.sigmoid(gx[:, H:2 * H] + gh[:, H:2 * H])
    n = jnp.tanh(gx[:, 2 * H:] + r * gh[:, 2 * H:])
    h_new = (1.0 - z) * n + z * hidden
    pred = jnp.concatenate([h_new, weighted, emb], axis=1) @ params["W_fc"].T + params["b_fc"]
    return pred, h_new


if __name__ == "__main__":
    # Small shapes consistent with the module; V a lane multiple so the pred
    # writeback is lane-dense, and TV chosen so the V-tiling path (NV > 1) runs.
    V = 1024   # output_dim (vocab)
    E = 32     # emb_dim
    H = 32     # hid_dim
    S = 8      # encoder src length
    B = 16     # batch (single batch tile -> MXU-dense, no per-tile overhead)

    key = jax.random.PRNGKey(0)
    ks = jax.random.split(key, 14)
    sc = 0.1
    params = {
        "emb_table": jax.random.normal(ks[0], (V, E), jnp.float32) * sc,
        "W_attn":    jax.random.normal(ks[1], (H, 3 * H), jnp.float32) * sc,       # Linear(3H -> H)
        "b_attn":    jax.random.normal(ks[2], (H,), jnp.float32) * sc,
        "v":         jax.random.normal(ks[3], (1, H), jnp.float32) * sc,           # Linear(H -> 1, no bias)
        "W_ih":      jax.random.normal(ks[4], (3 * H, E + 2 * H), jnp.float32) * sc,
        "W_hh":      jax.random.normal(ks[5], (3 * H, H), jnp.float32) * sc,
        "b_ih":      jax.random.normal(ks[6], (3 * H,), jnp.float32) * sc,
        "b_hh":      jax.random.normal(ks[7], (3 * H,), jnp.float32) * sc,
        "W_fc":      jax.random.normal(ks[8], (V, 3 * H + E), jnp.float32) * sc,   # Linear(3H+E -> V)
        "b_fc":      jax.random.normal(ks[9], (V,), jnp.float32) * sc,
    }

    input_ids = jax.random.randint(ks[10], (B,), 0, V, dtype=jnp.int32)   # token ids
    outputs = jax.random.normal(ks[11], (S, B, 2 * H), jnp.float32)       # encoder outputs
    hidden = jax.random.normal(ks[12], (B, H), jnp.float32)               # decoder hidden

    # reference first (hidden buffer may be aliased into the kernel's h_new output)
    pred_ref, h_ref = decoder_reference(input_ids, outputs, hidden, params)
    pred_ref, h_ref = jax.block_until_ready((pred_ref, h_ref))

    prepped = prepare_decoder_params(params)            # once per model
    enc, enc_proj = prepare_encoder_state(outputs, prepped)   # once per source sequence

    pred, h_new = decoder_forward(input_ids, enc, enc_proj, hidden, prepped, tv=256)
    jax.block_until_ready((pred, h_new))

    # bf16 weights + EUP approx-reciprocal softmax -> compare with loose tolerance
    np.testing.assert_allclose(np.asarray(pred), np.asarray(pred_ref), rtol=2e-2, atol=2e-2)
    np.testing.assert_allclose(np.asarray(h_new), np.asarray(h_ref), rtol=2e-2, atol=2e-2)

    print("KERNEL_OK")
</pallas_src>

<mosaic_0001>
module attributes {stable_mosaic.version = 11 : i64} {
  func.func @decoder_step_kernel(%arg0: i32, %arg1: i32, %arg2: memref<16x32xf32, #tpu.memory_space<vmem>>, %arg3: memref<16x32xf32, #tpu.memory_space<vmem>>, %arg4: memref<16x8x64xf32, #tpu.memory_space<vmem>>, %arg5: memref<16x8x32xf32, #tpu.memory_space<vmem>>, %arg6: memref<32x32xbf16, #tpu.memory_space<vmem>>, %arg7: memref<1x32xf32, #tpu.memory_space<vmem>>, %arg8: memref<1x32xf32, #tpu.memory_space<vmem>>, %arg9: memref<3x32x32xbf16, #tpu.memory_space<vmem>>, %arg10: memref<3x64x32xbf16, #tpu.memory_space<vmem>>, %arg11: memref<3x1x32xf32, #tpu.memory_space<vmem>>, %arg12: memref<3x32x32xbf16, #tpu.memory_space<vmem>>, %arg13: memref<3x1x32xf32, #tpu.memory_space<vmem>>, %arg14: memref<32x256xbf16, #tpu.memory_space<vmem>>, %arg15: memref<64x256xbf16, #tpu.memory_space<vmem>>, %arg16: memref<32x256xbf16, #tpu.memory_space<vmem>>, %arg17: memref<1x256xf32, #tpu.memory_space<vmem>>, %arg18: memref<16x256xf32, #tpu.memory_space<vmem>>, %arg19: memref<16x32xf32, #tpu.memory_space<vmem>>, %arg20: memref<16x64xf32, #tpu.memory_space<vmem>>, %arg21: memref<16x32xf32, #tpu.memory_space<vmem>>) attributes {dimension_semantics = [#tpu.dimension_semantics<parallel>, #tpu.dimension_semantics<arbitrary>], iteration_bounds = array<i64: 1, 4>, scalar_prefetch = 0 : i64, scratch_operands = 2 : i64, tpu.core_type = #tpu.core_type<tc>, window_params = [{transform_indices = @transform_0, window_bounds = array<i64: 16, 32>}, {transform_indices = @transform_1, window_bounds = array<i64: 16, 32>}, {transform_indices = @transform_2, window_bounds = array<i64: 16, 8, 64>}, {transform_indices = @transform_3, window_bounds = array<i64: 16, 8, 32>}, {pipeline_mode = #tpu.pipeline_mode<synchronous>, transform_indices = @transform_4, window_bounds = array<i64: 32, 32>}, {pipeline_mode = #tpu.pipeline_mode<synchronous>, transform_indices = @transform_5, window_bounds = array<i64: 1, 32>}, {pipeline_mode = #tpu.pipeline_mode<synchronous>, transform_indices = @transform_6, window_bounds = array<i64: 1, 32>}, {pipeline_mode = #tpu.pipeline_mode<synchronous>, transform_indices = @transform_7, window_bounds = array<i64: 3, 32, 32>}, {pipeline_mode = #tpu.pipeline_mode<synchronous>, transform_indices = @transform_8, window_bounds = array<i64: 3, 64, 32>}, {pipeline_mode = #tpu.pipeline_mode<synchronous>, transform_indices = @transform_9, window_bounds = array<i64: 3, 1, 32>}, {pipeline_mode = #tpu.pipeline_mode<synchronous>, transform_indices = @transform_10, window_bounds = array<i64: 3, 32, 32>}, {pipeline_mode = #tpu.pipeline_mode<synchronous>, transform_indices = @transform_11, window_bounds = array<i64: 3, 1, 32>}, {transform_indices = @transform_12, window_bounds = array<i64: 32, 256>}, {transform_indices = @transform_13, window_bounds = array<i64: 64, 256>}, {transform_indices = @transform_14, window_bounds = array<i64: 32, 256>}, {transform_indices = @transform_15, window_bounds = array<i64: 1, 256>}, {transform_indices = @transform_16, window_bounds = array<i64: 16, 256>}, {transform_indices = @transform_17, window_bounds = array<i64: 16, 32>}]} {
    %c0_i32 = arith.constant 0 : i32
    %0 = arith.cmpi eq, %arg1, %c0_i32 : i32
    %1 = arith.extui %0 : i1 to i32
    %c0_i32_0 = arith.constant 0 : i32
    %2 = arith.cmpi ne, %1, %c0_i32_0 : i32
    scf.if %2 {
      %c0_19 = arith.constant 0 : index
      %c0_20 = arith.constant 0 : index
      %24 = vector.load %arg2[%c0_19, %c0_20] : memref<16x32xf32, #tpu.memory_space<vmem>>, vector<16x32xf32>
      %c0_21 = arith.constant 0 : index
      %c0_22 = arith.constant 0 : index
      %25 = vector.load %arg3[%c0_21, %c0_22] : memref<16x32xf32, #tpu.memory_space<vmem>>, vector<16x32xf32>
      %c0_23 = arith.constant 0 : index
      %c0_24 = arith.constant 0 : index
      %c0_25 = arith.constant 0 : index
      %26 = vector.load %arg4[%c0_23, %c0_24, %c0_25] : memref<16x8x64xf32, #tpu.memory_space<vmem>>, vector<16x8x64xf32>
      %c0_26 = arith.constant 0 : index
      %c0_27 = arith.constant 0 : index
      %c0_28 = arith.constant 0 : index
      %27 = vector.load %arg5[%c0_26, %c0_27, %c0_28] : memref<16x8x32xf32, #tpu.memory_space<vmem>>, vector<16x8x32xf32>
      %28 = arith.truncf %25 : vector<16x32xf32> to vector<16x32xbf16>
      %c0_29 = arith.constant 0 : index
      %c0_30 = arith.constant 0 : index
      %29 = vector.load %arg6[%c0_29, %c0_30] : memref<32x32xbf16, #tpu.memory_space<vmem>>, vector<32x32xbf16>
      %cst_31 = arith.constant dense<0.000000e+00> : vector<16x32xf32>
      %30 = tpu.matmul %28, %29, %cst_31 {dimension_numbers = #tpu.dot_dimension_numbers<[1], [0], [0], [1], [0, 0, 1, 1], [], []>} : vector<16x32xbf16>, vector<32x32xbf16>, vector<16x32xf32> -> vector<16x32xf32>
      %c0_32 = arith.constant 0 : index
      %c0_33 = arith.constant 0 : index
      %31 = vector.load %arg7[%c0_32, %c0_33] : memref<1x32xf32, #tpu.memory_space<vmem>>, vector<1x32xf32>
      %32 = vector.broadcast %31 : vector<1x32xf32> to vector<16x32xf32>
      %33 = arith.addf %30, %32 : vector<16x32xf32>
      %34 = vector.shape_cast %33 : vector<16x32xf32> to vector<16x1x32xf32>
      %35 = vector.broadcast %34 : vector<16x1x32xf32> to vector<16x8x32xf32>
      %36 = arith.addf %27, %35 : vector<16x8x32xf32>
      %37 = math.tanh %36 : vector<16x8x32xf32>
      %c0_34 = arith.constant 0 : index
      %c0_35 = arith.constant 0 : index
      %38 = vector.load %arg8[%c0_34, %c0_35] : memref<1x32xf32, #tpu.memory_space<vmem>>, vector<1x32xf32>
      %39 = vector.shape_cast %38 : vector<1x32xf32> to vector<1x1x32xf32>
      %40 = vector.broadcast %39 : vector<1x1x32xf32> to vector<16x8x32xf32>
      %41 = arith.mulf %37, %40 : vector<16x8x32xf32>
      %cst_36 = arith.constant dense<0.000000e+00> : vector<16x8xf32>
      %42 = vector.multi_reduction <add>, %41, %cst_36 [2] : vector<16x8x32xf32> to vector<16x8xf32>
      %cst_37 = arith.constant dense<0xFF800000> : vector<16xf32>
      %43 = vector.multi_reduction <maximumf>, %42, %cst_37 [1] : vector<16x8xf32> to vector<16xf32>
      %44 = vector.shape_cast %43 : vector<16xf32> to vector<16x1xf32>
      %45 = vector.broadcast %44 : vector<16x1xf32> to vector<16x8xf32>
      %46 = arith.subf %42, %45 : vector<16x8xf32>
      %47 = math.exp %46 : vector<16x8xf32>
      %cst_38 = arith.constant dense<0.000000e+00> : vector<16xf32>
      %48 = vector.multi_reduction <add>, %47, %cst_38 [1] : vector<16x8xf32> to vector<16xf32>
      %49 = vector.shape_cast %48 : vector<16xf32> to vector<16x1xf32>
      %50 = tpu.reciprocal %49 {approx = true} : vector<16x1xf32> -> vector<16x1xf32>
      %51 = vector.broadcast %50 : vector<16x1xf32> to vector<16x8xf32>
      %52 = arith.mulf %47, %51 : vector<16x8xf32>
      %53 = vector.shape_cast %52 : vector<16x8xf32> to vector<16x8x1xf32>
      %54 = vector.broadcast %53 : vector<16x8x1xf32> to vector<16x8x64xf32>
      %55 = arith.mulf %54, %26 : vector<16x8x64xf32>
      %cst_39 = arith.constant dense<0.000000e+00> : vector<16x64xf32>
      %56 = vector.multi_reduction <add>, %55, %cst_39 [1] : vector<16x8x64xf32> to vector<16x64xf32>
      %c0_40 = arith.constant 0 : index
      %c0_41 = arith.constant 0 : index
      %57 = vector.load %arg20[%c0_40, %c0_41] : memref<16x64xf32, #tpu.memory_space<vmem>>, vector<16x64xf32>
      tpu.vector_store %arg20[%c0_40, %c0_41], %56 {strides = array<i32>} : memref<16x64xf32, #tpu.memory_space<vmem>>, vector<16x64xf32>,
      %58 = arith.truncf %24 : vector<16x32xf32> to vector<16x32xbf16>
      %59 = arith.truncf %56 : vector<16x64xf32> to vector<16x64xbf16>
      %c0_42 = arith.constant 0 : index
      %c0_43 = arith.constant 0 : index
      %c0_44 = arith.constant 0 : index
      %60 = vector.load %arg9[%c0_42, %c0_43, %c0_44] : memref<3x32x32xbf16, #tpu.memory_space<vmem>>, vector<1x32x32xbf16>
      %61 = vector.shape_cast %60 : vector<1x32x32xbf16> to vector<32x32xbf16>
      %cst_45 = arith.constant dense<0.000000e+00> : vector<16x32xf32>
      %62 = tpu.matmul %58, %61, %cst_45 {dimension_numbers = #tpu.dot_dimension_numbers<[1], [0], [0], [1], [0, 0, 1, 1], [], []>} : vector<16x32xbf16>, vector<32x32xbf16>, vector<16x32xf32> -> vector<16x32xf32>
      %c0_46 = arith.constant 0 : index
      %c0_47 = arith.constant 0 : index
      %c0_48 = arith.constant 0 : index
      %63 = vector.load %arg10[%c0_46, %c0_47, %c0_48] : memref<3x64x32xbf16, #tpu.memory_space<vmem>>, vector<1x64x32xbf16>
      %64 = vector.shape_cast %63 : vector<1x64x32xbf16> to vector<64x32xbf16>
      %cst_49 = arith.constant dense<0.000000e+00> : vector<16x32xf32>
      %65 = tpu.matmul %59, %64, %cst_49 {dimension_numbers = #tpu.dot_dimension_numbers<[1], [0], [0], [1], [0, 0, 1, 1], [], []>} : vector<16x64xbf16>, vector<64x32xbf16>, vector<16x32xf32> -> vector<16x32xf32>
      %66 = arith.addf %62, %65 : vector<16x32xf32>
      %c0_50 = arith.constant 0 : index
      %c0_51 = arith.constant 0 : index
      %c0_52 = arith.constant 0 : index
      %67 = vector.load %arg11[%c0_50, %c0_51, %c0_52] : memref<3x1x32xf32, #tpu.memory_space<vmem>>, vector<1x1x32xf32>
      %68 = vector.shape_cast %67 : vector<1x1x32xf32> to vector<1x32xf32>
      %69 = vector.broadcast %68 : vector<1x32xf32> to vector<16x32xf32>
      %70 = arith.addf %66, %69 : vector<16x32xf32>
      %c0_53 = arith.constant 0 : index
      %c0_54 = arith.constant 0 : index
      %c0_55 = arith.constant 0 : index
      %71 = vector.load %arg12[%c0_53, %c0_54, %c0_55] : memref<3x32x32xbf16, #tpu.memory_space<vmem>>, vector<1x32x32xbf16>
      %72 = vector.shape_cast %71 : vector<1x32x32xbf16> to vector<32x32xbf16>
      %cst_56 = arith.constant dense<0.000000e+00> : vector<16x32xf32>
      %73 = tpu.matmul %28, %72, %cst_56 {dimension_numbers = #tpu.dot_dimension_numbers<[1], [0], [0], [1], [0, 0, 1, 1], [], []>} : vector<16x32xbf16>, vector<32x32xbf16>, vector<16x32xf32> -> vector<16x32xf32>
      %c0_57 = arith.constant 0 : index
      %c0_58 = arith.constant 0 : index
      %c0_59 = arith.constant 0 : index
      %74 = vector.load %arg13[%c0_57, %c0_58, %c0_59] : memref<3x1x32xf32, #tpu.memory_space<vmem>>, vector<1x1x32xf32>
      %75 = vector.shape_cast %74 : vector<1x1x32xf32> to vector<1x32xf32>
      %76 = vector.broadcast %75 : vector<1x32xf32> to vector<16x32xf32>
      %77 = arith.addf %73, %76 : vector<16x32xf32>
      %c1 = arith.constant 1 : index
      %c0_60 = arith.constant 0 : index
      %c0_61 = arith.constant 0 : index
      %78 = vector.load %arg9[%c1, %c0_60, %c0_61] : memref<3x32x32xbf16, #tpu.memory_space<vmem>>, vector<1x32x32xbf16>
      %79 = vector.shape_cast %78 : vector<1x32x32xbf16> to vector<32x32xbf16>
      %cst_62 = arith.constant dense<0.000000e+00> : vector<16x32xf32>
      %80 = tpu.matmul %58, %79, %cst_62 {dimension_numbers = #tpu.dot_dimension_numbers<[1], [0], [0], [1], [0, 0, 1, 1], [], []>} : vector<16x32xbf16>, vector<32x32xbf16>, vector<16x32xf32> -> vector<16x32xf32>
      %c1_63 = arith.constant 1 : index
      %c0_64 = arith.constant 0 : index
      %c0_65 = arith.constant 0 : index
      %81 = vector.load %arg10[%c1_63, %c0_64, %c0_65] : memref<3x64x32xbf16, #tpu.memory_space<vmem>>, vector<1x64x32xbf16>
      %82 = vector.shape_cast %81 : vector<1x64x32xbf16> to vector<64x32xbf16>
      %cst_66 = arith.constant dense<0.000000e+00> : vector<16x32xf32>
      %83 = tpu.matmul %59, %82, %cst_66 {dimension_numbers = #tpu.dot_dimension_numbers<[1], [0], [0], [1], [0, 0, 1, 1], [], []>} : vector<16x64xbf16>, vector<64x32xbf16>, vector<16x32xf32> -> vector<16x32xf32>
      %84 = arith.addf %80, %83 : vector<16x32xf32>
      %c1_67 = arith.constant 1 : index
      %c0_68 = arith.constant 0 : index
      %c0_69 = arith.constant 0 : index
      %85 = vector.load %arg11[%c1_67, %c0_68, %c0_69] : memref<3x1x32xf32, #tpu.memory_space<vmem>>, vector<1x1x32xf32>
      %86 = vector.shape_cast %85 : vector<1x1x32xf32> to vector<1x32xf32>
      %87 = vector.broadcast %86 : vector<1x32xf32> to vector<16x32xf32>
      %88 = arith.addf %84, %87 : vector<16x32xf32>
      %c1_70 = arith.constant 1 : index
      %c0_71 = arith.constant 0 : index
      %c0_72 = arith.constant 0 : index
      %89 = vector.load %arg12[%c1_70, %c0_71, %c0_72] : memref<3x32x32xbf16, #tpu.memory_space<vmem>>, vector<1x32x32xbf16>
      %90 = vector.shape_cast %89 : vector<1x32x32xbf16> to vector<32x32xbf16>
      %cst_73 = arith.constant dense<0.000000e+00> : vector<16x32xf32>
      %91 = tpu.matmul %28, %90, %cst_73 {dimension_numbers = #tpu.dot_dimension_numbers<[1], [0], [0], [1], [0, 0, 1, 1], [], []>} : vector<16x32xbf16>, vector<32x32xbf16>, vector<16x32xf32> -> vector<16x32xf32>
      %c1_74 = arith.constant 1 : index
      %c0_75 = arith.constant 0 : index
      %c0_76 = arith.constant 0 : index
      %92 = vector.load %arg13[%c1_74, %c0_75, %c0_76] : memref<3x1x32xf32, #tpu.memory_space<vmem>>, vector<1x1x32xf32>
      %93 = vector.shape_cast %92 : vector<1x1x32xf32> to vector<1x32xf32>
      %94 = vector.broadcast %93 : vector<1x32xf32> to vector<16x32xf32>
      %95 = arith.addf %91, %94 : vector<16x32xf32>
      %c2 = arith.constant 2 : index
      %c0_77 = arith.constant 0 : index
      %c0_78 = arith.constant 0 : index
      %96 = vector.load %arg9[%c2, %c0_77, %c0_78] : memref<3x32x32xbf16, #tpu.memory_space<vmem>>, vector<1x32x32xbf16>
      %97 = vector.shape_cast %96 : vector<1x32x32xbf16> to vector<32x32xbf16>
      %cst_79 = arith.constant dense<0.000000e+00> : vector<16x32xf32>
      %98 = tpu.matmul %58, %97, %cst_79 {dimension_numbers = #tpu.dot_dimension_numbers<[1], [0], [0], [1], [0, 0, 1, 1], [], []>} : vector<16x32xbf16>, vector<32x32xbf16>, vector<16x32xf32> -> vector<16x32xf32>
      %c2_80 = arith.constant 2 : index
      %c0_81 = arith.constant 0 : index
      %c0_82 = arith.constant 0 : index
      %99 = vector.load %arg10[%c2_80, %c0_81, %c0_82] : memref<3x64x32xbf16, #tpu.memory_space<vmem>>, vector<1x64x32xbf16>
      %100 = vector.shape_cast %99 : vector<1x64x32xbf16> to vector<64x32xbf16>
      %cst_83 = arith.constant dense<0.000000e+00> : vector<16x32xf32>
      %101 = tpu.matmul %59, %100, %cst_83 {dimension_numbers = #tpu.dot_dimension_numbers<[1], [0], [0], [1], [0, 0, 1, 1], [], []>} : vector<16x64xbf16>, vector<64x32xbf16>, vector<16x32xf32> -> vector<16x32xf32>
      %102 = arith.addf %98, %101 : vector<16x32xf32>
      %c2_84 = arith.constant 2 : index
      %c0_85 = arith.constant 0 : index
      %c0_86 = arith.constant 0 : index
      %103 = vector.load %arg11[%c2_84, %c0_85, %c0_86] : memref<3x1x32xf32, #tpu.memory_space<vmem>>, vector<1x1x32xf32>
      %104 = vector.shape_cast %103 : vector<1x1x32xf32> to vector<1x32xf32>
      %105 = vector.broadcast %104 : vector<1x32xf32> to vector<16x32xf32>
      %106 = arith.addf %102, %105 : vector<16x32xf32>
      %c2_87 = arith.constant 2 : index
      %c0_88 = arith.constant 0 : index
      %c0_89 = arith.constant 0 : index
      %107 = vector.load %arg12[%c2_87, %c0_88, %c0_89] : memref<3x32x32xbf16, #tpu.memory_space<vmem>>, vector<1x32x32xbf16>
      %108 = vector.shape_cast %107 : vector<1x32x32xbf16> to vector<32x32xbf16>
      %cst_90 = arith.constant dense<0.000000e+00> : vector<16x32xf32>
      %109 = tpu.matmul %28, %108, %cst_90 {dimension_numbers = #tpu.dot_dimension_numbers<[1], [0], [0], [1], [0, 0, 1, 1], [], []>} : vector<16x32xbf16>, vector<32x32xbf16>, vector<16x32xf32> -> vector<16x32xf32>
      %c2_91 = arith.constant 2 : index
      %c0_92 = arith.constant 0 : index
      %c0_93 = arith.constant 0 : index
      %110 = vector.load %arg13[%c2_91, %c0_92, %c0_93] : memref<3x1x32xf32, #tpu.memory_space<vmem>>, vector<1x1x32xf32>
      %111 = vector.shape_cast %110 : vector<1x1x32xf32> to vector<1x32xf32>
      %112 = vector.broadcast %111 : vector<1x32xf32> to vector<16x32xf32>
      %113 = arith.addf %109, %112 : vector<16x32xf32>
      %114 = arith.addf %70, %77 : vector<16x32xf32>
      %115 = arith.negf %114 : vector<16x32xf32>
      %116 = math.exp %115 : vector<16x32xf32>
      %cst_94 = arith.constant 1.000000e+00 : f32
      %117 = vector.broadcast %cst_94 : f32 to vector<16x32xf32>
      %118 = arith.addf %117, %116 : vector<16x32xf32>
      %119 = arith.divf %117, %118 : vector<16x32xf32>
      %120 = arith.addf %88, %95 : vector<16x32xf32>
      %121 = arith.negf %120 : vector<16x32xf32>
      %122 = math.exp %121 : vector<16x32xf32>
      %cst_95 = arith.constant 1.000000e+00 : f32
      %123 = vector.broadcast %cst_95 : f32 to vector<16x32xf32>
      %124 = arith.addf %123, %122 : vector<16x32xf32>
      %125 = arith.divf %123, %124 : vector<16x32xf32>
      %126 = arith.mulf %119, %113 : vector<16x32xf32>
      %127 = arith.addf %106, %126 : vector<16x32xf32>
      %128 = math.tanh %127 : vector<16x32xf32>
      %cst_96 = arith.constant 1.000000e+00 : f32
      %129 = vector.broadcast %cst_96 : f32 to vector<16x32xf32>
      %130 = arith.subf %129, %125 : vector<16x32xf32>
      %131 = arith.mulf %130, %128 : vector<16x32xf32>
      %132 = arith.mulf %125, %25 : vector<16x32xf32>
      %133 = arith.addf %131, %132 : vector<16x32xf32>
      %c0_97 = arith.constant 0 : index
      %c0_98 = arith.constant 0 : index
      %134 = vector.load %arg21[%c0_97, %c0_98] : memref<16x32xf32, #tpu.memory_space<vmem>>, vector<16x32xf32>
      tpu.vector_store %arg21[%c0_97, %c0_98], %133 {strides = array<i32>} : memref<16x32xf32, #tpu.memory_space<vmem>>, vector<16x32xf32>,
    } else {
    }
    %c0 = arith.constant 0 : index
    %c0_1 = arith.constant 0 : index
    %3 = vector.load %arg21[%c0, %c0_1] : memref<16x32xf32, #tpu.memory_space<vmem>>, vector<16x32xf32>
    %4 = arith.truncf %3 : vector<16x32xf32> to vector<16x32xbf16>
    %c0_2 = arith.constant 0 : index
    %c0_3 = arith.constant 0 : index
    %5 = vector.load %arg14[%c0_2, %c0_3] : memref<32x256xbf16, #tpu.memory_space<vmem>>, vector<32x256xbf16>
    %cst = arith.constant dense<0.000000e+00> : vector<16x256xf32>
    %6 = tpu.matmul %4, %5, %cst {dimension_numbers = #tpu.dot_dimension_numbers<[1], [0], [0], [1], [0, 0, 1, 1], [], []>} : vector<16x32xbf16>, vector<32x256xbf16>, vector<16x256xf32> -> vector<16x256xf32>
    %c0_4 = arith.constant 0 : index
    %c0_5 = arith.constant 0 : index
    %7 = vector.load %arg20[%c0_4, %c0_5] : memref<16x64xf32, #tpu.memory_space<vmem>>, vector<16x64xf32>
    %8 = arith.truncf %7 : vector<16x64xf32> to vector<16x64xbf16>
    %c0_6 = arith.constant 0 : index
    %c0_7 = arith.constant 0 : index
    %9 = vector.load %arg15[%c0_6, %c0_7] : memref<64x256xbf16, #tpu.memory_space<vmem>>, vector<64x256xbf16>
    %cst_8 = arith.constant dense<0.000000e+00> : vector<16x256xf32>
    %10 = tpu.matmul %8, %9, %cst_8 {dimension_numbers = #tpu.dot_dimension_numbers<[1], [0], [0], [1], [0, 0, 1, 1], [], []>} : vector<16x64xbf16>, vector<64x256xbf16>, vector<16x256xf32> -> vector<16x256xf32>
    %11 = arith.addf %6, %10 : vector<16x256xf32>
    %c0_9 = arith.constant 0 : index
    %c0_10 = arith.constant 0 : index
    %12 = vector.load %arg2[%c0_9, %c0_10] : memref<16x32xf32, #tpu.memory_space<vmem>>, vector<16x32xf32>
    %13 = arith.truncf %12 : vector<16x32xf32> to vector<16x32xbf16>
    %c0_11 = arith.constant 0 : index
    %c0_12 = arith.constant 0 : index
    %14 = vector.load %arg16[%c0_11, %c0_12] : memref<32x256xbf16, #tpu.memory_space<vmem>>, vector<32x256xbf16>
    %cst_13 = arith.constant dense<0.000000e+00> : vector<16x256xf32>
    %15 = tpu.matmul %13, %14, %cst_13 {dimension_numbers = #tpu.dot_dimension_numbers<[1], [0], [0], [1], [0, 0, 1, 1], [], []>} : vector<16x32xbf16>, vector<32x256xbf16>, vector<16x256xf32> -> vector<16x256xf32>
    %16 = arith.addf %11, %15 : vector<16x256xf32>
    %c0_14 = arith.constant 0 : index
    %c0_15 = arith.constant 0 : index
    %17 = vector.load %arg17[%c0_14, %c0_15] : memref<1x256xf32, #tpu.memory_space<vmem>>, vector<1x256xf32>
    %18 = vector.broadcast %17 : vector<1x256xf32> to vector<16x256xf32>
    %19 = arith.addf %16, %18 : vector<16x256xf32>
    %c0_16 = arith.constant 0 : index
    %c0_17 = arith.constant 0 : index
    %20 = vector.load %arg18[%c0_16, %c0_17] : memref<16x256xf32, #tpu.memory_space<vmem>>, vector<16x256xf32>
    tpu.vector_store %arg18[%c0_16, %c0_17], %19 {strides = array<i32>} : memref<16x256xf32, #tpu.memory_space<vmem>>, vector<16x256xf32>,
    %c3_i32 = arith.constant 3 : i32
    %21 = arith.cmpi eq, %arg1, %c3_i32 : i32
    %22 = arith.extui %21 : i1 to i32
    %c0_i32_18 = arith.constant 0 : i32
    %23 = arith.cmpi ne, %22, %c0_i32_18 : i32
    scf.if %23 {
      %c0_19 = arith.constant 0 : index
      %c0_20 = arith.constant 0 : index
      %24 = vector.load %arg21[%c0_19, %c0_20] : memref<16x32xf32, #tpu.memory_space<vmem>>, vector<16x32xf32>
      %c0_21 = arith.constant 0 : index
      %c0_22 = arith.constant 0 : index
      %25 = vector.load %arg19[%c0_21, %c0_22] : memref<16x32xf32, #tpu.memory_space<vmem>>, vector<16x32xf32>
      tpu.vector_store %arg19[%c0_21, %c0_22], %24 {strides = array<i32>} : memref<16x32xf32, #tpu.memory_space<vmem>>, vector<16x32xf32>,
    } else {
    }
    return
  }
  func.func @transform_0(%arg0: i32, %arg1: i32) -> (i32, i32) {
    %c0_i32 = arith.constant 0 : i32
    %c0_i32_0 = arith.constant 0 : i32
    return %arg0, %c0_i32 : i32, i32
  }
  func.func @transform_1(%arg0: i32, %arg1: i32) -> (i32, i32) {
    %c0_i32 = arith.constant 0 : i32
    %c0_i32_0 = arith.constant 0 : i32
    return %arg0, %c0_i32 : i32, i32
  }
  func.func @transform_2(%arg0: i32, %arg1: i32) -> (i32, i32, i32) {
    %c0_i32 = arith.constant 0 : i32
    %c0_i32_0 = arith.constant 0 : i32
    %c0_i32_1 = arith.constant 0 : i32
    return %arg0, %c0_i32, %c0_i32_0 : i32, i32, i32
  }
  func.func @transform_3(%arg0: i32, %arg1: i32) -> (i32, i32, i32) {
    %c0_i32 = arith.constant 0 : i32
    %c0_i32_0 = arith.constant 0 : i32
    %c0_i32_1 = arith.constant 0 : i32
    return %arg0, %c0_i32, %c0_i32_0 : i32, i32, i32
  }
  func.func @transform_4(%arg0: i32, %arg1: i32) -> (i32, i32) {
    %c0_i32 = arith.constant 0 : i32
    %c0_i32_0 = arith.constant 0 : i32
    %c0_i32_1 = arith.constant 0 : i32
    return %c0_i32, %c0_i32_0 : i32, i32
  }
  func.func @transform_5(%arg0: i32, %arg1: i32) -> (i32, i32) {
    %c0_i32 = arith.constant 0 : i32
    %c0_i32_0 = arith.constant 0 : i32
    %c0_i32_1 = arith.constant 0 : i32
    return %c0_i32, %c0_i32_0 : i32, i32
  }
  func.func @transform_6(%arg0: i32, %arg1: i32) -> (i32, i32) {
    %c0_i32 = arith.constant 0 : i32
    %c0_i32_0 = arith.constant 0 : i32
    %c0_i32_1 = arith.constant 0 : i32
    return %c0_i32, %c0_i32_0 : i32, i32
  }
  func.func @transform_7(%arg0: i32, %arg1: i32) -> (i32, i32, i32) {
    %c0_i32 = arith.constant 0 : i32
    %c0_i32_0 = arith.constant 0 : i32
    %c0_i32_1 = arith.constant 0 : i32
    %c0_i32_2 = arith.constant 0 : i32
    return %c0_i32, %c0_i32_0, %c0_i32_1 : i32, i32, i32
  }
  func.func @transform_8(%arg0: i32, %arg1: i32) -> (i32, i32, i32) {
    %c0_i32 = arith.constant 0 : i32
    %c0_i32_0 = arith.constant 0 : i32
    %c0_i32_1 = arith.constant 0 : i32
    %c0_i32_2 = arith.constant 0 : i32
    return %c0_i32, %c0_i32_0, %c0_i32_1 : i32, i32, i32
  }
  func.func @transform_9(%arg0: i32, %arg1: i32) -> (i32, i32, i32) {
    %c0_i32 = arith.constant 0 : i32
    %c0_i32_0 = arith.constant 0 : i32
    %c0_i32_1 = arith.constant 0 : i32
    %c0_i32_2 = arith.constant 0 : i32
    return %c0_i32, %c0_i32_0, %c0_i32_1 : i32, i32, i32
  }
  func.func @transform_10(%arg0: i32, %arg1: i32) -> (i32, i32, i32) {
    %c0_i32 = arith.constant 0 : i32
    %c0_i32_0 = arith.constant 0 : i32
    %c0_i32_1 = arith.constant 0 : i32
    %c0_i32_2 = arith.constant 0 : i32
    return %c0_i32, %c0_i32_0, %c0_i32_1 : i32, i32, i32
  }
  func.func @transform_11(%arg0: i32, %arg1: i32) -> (i32, i32, i32) {
    %c0_i32 = arith.constant 0 : i32
    %c0_i32_0 = arith.constant 0 : i32
    %c0_i32_1 = arith.constant 0 : i32
    %c0_i32_2 = arith.constant 0 : i32
    return %c0_i32, %c0_i32_0, %c0_i32_1 : i32, i32, i32
  }
  func.func @transform_12(%arg0: i32, %arg1: i32) -> (i32, i32) {
    %c0_i32 = arith.constant 0 : i32
    %c0_i32_0 = arith.constant 0 : i32
    return %c0_i32, %arg1 : i32, i32
  }
  func.func @transform_13(%arg0: i32, %arg1: i32) -> (i32, i32) {
    %c0_i32 = arith.constant 0 : i32
    %c0_i32_0 = arith.constant 0 : i32
    return %c0_i32, %arg1 : i32, i32
  }
  func.func @transform_14(%arg0: i32, %arg1: i32) -> (i32, i32) {
    %c0_i32 = arith.constant 0 : i32
    %c0_i32_0 = arith.constant 0 : i32
    return %c0_i32, %arg1 : i32, i32
  }
  func.func @transform_15(%arg0: i32, %arg1: i32) -> (i32, i32) {
    %c0_i32 = arith.constant 0 : i32
    %c0_i32_0 = arith.constant 0 : i32
    return %c0_i32, %arg1 : i32, i32
  }
  func.func @transform_16(%arg0: i32, %arg1: i32) -> (i32, i32) {
    %c0_i32 = arith.constant 0 : i32
    return %arg0, %arg1 : i32, i32
  }
  func.func @transform_17(%arg0: i32, %arg1: i32) -> (i32, i32) {
    %c0_i32 = arith.constant 0 : i32
    %c0_i32_0 = arith.constant 0 : i32
    return %arg0, %c0_i32 : i32, i32
  }
}

</mosaic_0001>

<llo_original>
// kernel: tpu_custom_call.1
$region0: #{tpu_custom_call.1}
  #allocation0 [shape = 'u32[]', space=smem, size = 0x4, offset = 0x4, fixed_abs, tag = 'smem constant byte address 0x4 - core index']
  #allocation1 [shape = 'u32[72,128]{1,0:T(1,128)}', space=vmem, size = 0x9000, scoped, tag = 'internal scratch']
  #allocation2 [shape = 'f32[16,64]{1,0:T(8,128)}', space=vmem, size = 0x2000, scoped, tag = 'scratch operand']
  #allocation3 [shape = 'f32[16,32]{1,0:T(8,128)}', space=vmem, size = 0x2000, scoped, tag = 'scratch operand']
  %s0 = inlined_call_operand.hbm [shape: f32[16,32], index: 0, kind: input, shape index: {}]
  %s1 = inlined_call_operand.hbm [shape: f32[16,32], index: 1, kind: input, shape index: {}, may-alias: {1,17}]
  %s2 = inlined_call_operand.vmem [shape: f32[16,8,64], index: 2, kind: input, shape index: {}]
  %s3 = inlined_call_operand.hbm [shape: f32[16,8,32], index: 3, kind: input, shape index: {}]
  %s4 = inlined_call_operand.hbm [shape: bf16[32,32], index: 4, kind: input, shape index: {}]
  %s5 = inlined_call_operand.vmem [shape: f32[1,32], index: 5, kind: input, shape index: {}]
  %s6 = inlined_call_operand.hbm [shape: f32[1,32], index: 6, kind: input, shape index: {}]
  %s7 = inlined_call_operand.vmem [shape: bf16[3,32,32], index: 7, kind: input, shape index: {}]
  %s8 = inlined_call_operand.vmem [shape: bf16[3,64,32], index: 8, kind: input, shape index: {}]
  %s9 = inlined_call_operand.vmem [shape: f32[3,1,32], index: 9, kind: input, shape index: {}]
  %s10 = inlined_call_operand.hbm [shape: bf16[3,32,32], index: 10, kind: input, shape index: {}]
  %s11 = inlined_call_operand.hbm [shape: f32[3,1,32], index: 11, kind: input, shape index: {}]
  %s12 = inlined_call_operand.hbm [shape: bf16[32,1024], index: 12, kind: input, shape index: {}]
  %s13 = inlined_call_operand.hbm [shape: bf16[64,1024], index: 13, kind: input, shape index: {}]
  %s14 = inlined_call_operand.hbm [shape: bf16[32,1024], index: 14, kind: input, shape index: {}]
  %s15 = inlined_call_operand.vmem [shape: f32[1,1024], index: 15, kind: input, shape index: {}]
  %s16 = inlined_call_operand.hbm [shape: f32[16,1024], index: 16, kind: output, shape index: {0}]
  %s17 = inlined_call_operand.hbm [shape: f32[16,32], index: 17, kind: output, shape index: {1}, may-alias: {1,17}]
  %18 = xla_tuple %s16, %s17
  %s19 = sld [smem:[#allocation0]]
  $region153: #{tpu_custom_call.1} parent=0
    _
  %s21 = ssub.s32 1, %s19
  %s22 = scalar_select 0, %s21, %s19
  $region1: #{tpu_custom_call.1} parent=0
    #allocation4 [shape = 'u8[8192]{0}', space=vmem, size = 0x2000, scoped, tag = 'input window, operand 0, single buffered']
    #allocation5 [shape = 's32[2]{0}', space=sflag, size = 0x8, scoped, tag = 'scoped memory for tpu_custom_call.1']
    #allocation6 [shape = 's32[2]{0}', space=sflag, size = 0x8, scoped, tag = 'scoped memory for tpu_custom_call.1']
    #allocation7 [shape = 'u8[8192]{0}', space=vmem, size = 0x2000, scoped, tag = 'input window, operand 1, single buffered']
    #allocation8 [shape = 's32[1]{0}', space=sflag, size = 0x4, scoped, tag = 'scoped memory for tpu_custom_call.1']
    #allocation9 [shape = 'u8[65536]{0}', space=vmem, size = 0x10000, scoped, tag = 'input window, operand 3, single buffered']
    #allocation10 [shape = 'u8[8192]{0}', space=vmem, size = 0x2000, scoped, tag = 'input window, operand 4, single buffered']
    #allocation11 [shape = 's32[1]{0}', space=sflag, size = 0x4, scoped, tag = 'scoped memory for tpu_custom_call.1']
    #allocation12 [shape = 'u8[512]{0}', space=vmem, size = 0x400, scoped, tag = 'input window, operand 6, single buffered']
    #allocation13 [shape = 'u8[24576]{0}', space=vmem, size = 0x6000, scoped, tag = 'input window, operand 10, single buffered']
    #allocation14 [shape = 's32[1]{0}', space=sflag, size = 0x4, scoped, tag = 'scoped memory for tpu_custom_call.1']
    #allocation15 [shape = 'u8[1536]{0}', space=vmem, size = 0x800, scoped, tag = 'input window, operand 11, single buffered']
    #allocation16 [shape = 'u8[32768]{0}', space=vmem, size = 0x8000, scoped, tag = 'input window, operand 12']
    #allocation17 [shape = 's32[2]{0}', space=sflag, size = 0x8, scoped, tag = 'scoped memory for tpu_custom_call.1']
    #allocation18 [shape = 'u8[65536]{0}', space=vmem, size = 0x10000, scoped, tag = 'input window, operand 13']
    #allocation19 [shape = 'u8[32768]{0}', space=vmem, size = 0x8000, scoped, tag = 'input window, operand 14']
    #allocation20 [shape = 's32[2]{0}', space=sflag, size = 0x8, scoped, tag = 'scoped memory for tpu_custom_call.1']
    #allocation21 [shape = 'u8[32768]{0}', space=vmem, size = 0x8000, scoped, tag = 'output window, operand 0']
    #allocation22 [shape = 'u8[8192]{0}', space=vmem, size = 0x2000, scoped, tag = 'output window, operand 1, single buffered']
    #allocation23 [shape = 's32[1]{0}', space=sflag, size = 0x4, scoped, tag = 'scoped memory for tpu_custom_call.1']
    %23 = vsyncpa [#allocation5], 0
    %24 = vsyncpa [#allocation8], 0
    %25 = vsyncpa [#allocation11], 0
    %26 = vsyncpa [#allocation14], 0
    %27 = vsyncpa [#allocation17], 0
    %s28 = scalar_lea.sflag [#allocation17], 1
    %29 = vsyncpa %s28, 0
    %30 = vsyncpa [#allocation20], 0
    %s31 = scalar_lea.sflag [#allocation20], 1
    %32 = vsyncpa %s31, 0
    %33 = vsyncpa [#allocation6], 0
    %s34 = scalar_lea.sflag [#allocation6], 1
    %35 = vsyncpa %s34, 0
    %36 = vsyncpa [#allocation23], 0
    loop: start=0, step=1, limit=6
    $region2: #{tpu_custom_call.1} parent=1 // loop_pre_header
      _
    $region3: #{tpu_custom_call.1} parent=1 // loop_header
      %s38 = sphi 0, %s42
      %p39 = scmp.ge.s32.totalorder %s38, 6
      %s45 = sphi 0, %s57
      %s46 = sphi 0, %s53
      %s47 = sphi 0, %s45
      %s48 = sphi 0, %s46
      %s49 = sphi 0, %s47
      %s50 = sphi 0, %s48
      %s60 = sphi 0, %s62
      %s63 = sphi 0, %s60
      %s64 = sphi 0, %s63
      %s80 = sphi 0, %s64
      %s86 = sphi 0, %s88
      %s89 = sphi 0, %s86
      %s90 = sphi 0, %s89
      %s106 = sphi 0, %s90
      %s112 = sphi 0, %s114
      %s115 = sphi 0, %s112
      %s116 = sphi 0, %s115
      %s132 = sphi 0, %s116
      %s138 = sphi 0, %s140
      %s141 = sphi 0, %s138
      %s142 = sphi 0, %s141
      %s158 = sphi 0, %s142
      %s162 = sphi 0, %s162
      %s164 = sphi 0, %s162
      %s165 = sphi 0, %s164
      %s179 = sphi 0, %s165
      %s183 = sphi 0, %s183
      %s185 = sphi 0, %s183
      %s186 = sphi 0, %s185
      %s200 = sphi 0, %s186
      %s204 = sphi 0, %s204
      %s206 = sphi 0, %s204
      %s207 = sphi 0, %s206
      %s221 = sphi 0, %s207
      %s225 = sphi 0, %s225
      %s227 = sphi 0, %s225
      %s228 = sphi 0, %s227
      %s242 = sphi 0, %s228
      %s246 = sphi 0, %s246
      %s248 = sphi 0, %s246
      %s249 = sphi 0, %s248
      %s263 = sphi 0, %s249
      %s267 = sphi 0, %s267
      %s269 = sphi 0, %s267
      %s270 = sphi 0, %s269
      %s284 = sphi 0, %s270
      %s288 = sphi 0, %s288
      %s290 = sphi 0, %s288
      %s291 = sphi 0, %s290
      %s305 = sphi 0, %s291
      %s309 = sphi 0, %s309
      %s311 = sphi 0, %s309
      %s312 = sphi 0, %s311
      %s326 = sphi 0, %s312
      %s332 = sphi 0, %s334
      %s335 = sphi 0, %s332
      %s336 = sphi 0, %s335
      %s352 = sphi 0, %s336
      %s358 = sphi 0, %s360
      %s361 = sphi 0, %s358
      %s362 = sphi 0, %s361
      %s378 = sphi 0, %s362
      %s384 = sphi 0, %s386
      %s387 = sphi 0, %s384
      %s388 = sphi 0, %s387
      %s404 = sphi 0, %s388
      %s410 = sphi 0, %s412
      %s413 = sphi 0, %s410
      %s414 = sphi 0, %s413
      %s430 = sphi 0, %s414
      %s438 = sphi 0, %s440
      %s441 = sphi 0, %s438
      %s442 = sphi 0, %s441
      %s458 = sphi 0, %s442
      %s464 = sphi 0, %s466
      %s467 = sphi 0, %s464
      %s468 = sphi 0, %s467
      %s484 = sphi 0, %s468
    $region4: #{tpu_custom_call.1} parent=1 // loop_header_branch
      %41 = sbr.rel (%p39) target = $region8
    $region5: #{tpu_custom_call.1} parent=1 // loop_body
      %s43 = ssub.s32 %s38, 1
      %s44 = ssub.s32 %s38, 2
      %s51 = sadd.s32 1, %s46
      %p52 = scmp.ge.s32.totalorder %s51, 4
      %s53 = scalar_select %p52, 0, %s51
      %s54 = sadd.s32 1, %s45
      %s55 = scalar_select %p52, %s54, %s45
      %p56 = scmp.ge.s32.totalorder %s55, 1
      %s57 = scalar_select %p56, 0, %s55
      %s58 = ssub.s32 %s45, %s57
      %p59 = scmp.eq.s32.totalorder %s58, 0
      %s61 = sadd.s32 %s60, 1
      %s62 = scalar_select %p59, %s60, %s61
      %p65 = pneg %p59
      %p66 = scmp.eq.s32.totalorder %s38, 3
      %p67 = por %p65, %p66
      %p68 = scmp.ne.s32.totalorder %s60, %s63
      %p69 = scmp.eq.s32.totalorder %s38, 0
      %p70 = por %p68, %p69
      %p71 = scmp.ne.s32.totalorder %s60, %s63
      %p72 = scmp.eq.s32.totalorder %s43, 3
      %p73 = por %p71, %p72
      %p74 = scmp.ne.s32.totalorder %s63, %s64
      %p75 = scmp.eq.s32.totalorder %s43, 0
      %p76 = por %p74, %p75
      %p77 = scmp.ne.s32.totalorder %s63, %s64
      %p78 = scmp.eq.s32.totalorder %s44, 3
      %p79 = por %p77, %p78
      %p81 = scmp.ne.s32.totalorder %s64, %s80
      %p82 = scmp.eq.s32.totalorder %s44, 0
      %p83 = por %p81, %p82
      %s84 = ssub.s32 %s45, %s57
      %p85 = scmp.eq.s32.totalorder %s84, 0
      %s87 = sadd.s32 %s86, 1
      %s88 = scalar_select %p85, %s86, %s87
      %p91 = pneg %p85
      %p92 = scmp.eq.s32.totalorder %s38, 3
      %p93 = por %p91, %p92
      %p94 = scmp.ne.s32.totalorder %s86, %s89
      %p95 = scmp.eq.s32.totalorder %s38, 0
      %p96 = por %p94, %p95
      %p97 = scmp.ne.s32.totalorder %s86, %s89
      %p98 = scmp.eq.s32.totalorder %s43, 3
      %p99 = por %p97, %p98
      %p100 = scmp.ne.s32.totalorder %s89, %s90
      %p101 = scmp.eq.s32.totalorder %s43, 0
      %p102 = por %p100, %p101
      %p103 = scmp.ne.s32.totalorder %s89, %s90
      %p104 = scmp.eq.s32.totalorder %s44, 3
      %p105 = por %p103, %p104
      %p107 = scmp.ne.s32.totalorder %s90, %s106
      %p108 = scmp.eq.s32.totalorder %s44, 0
      %p109 = por %p107, %p108
      %s110 = ssub.s32 %s45, %s57
      %p111 = scmp.eq.s32.totalorder %s110, 0
      %s113 = sadd.s32 %s112, 1
      %s114 = scalar_select %p111, %s112, %s113
      %p117 = pneg %p111
      %p118 = scmp.eq.s32.totalorder %s38, 3
      %p119 = por %p117, %p118
      %p120 = scmp.ne.s32.totalorder %s112, %s115
      %p121 = scmp.eq.s32.totalorder %s38, 0
      %p122 = por %p120, %p121
      %p123 = scmp.ne.s32.totalorder %s112, %s115
      %p124 = scmp.eq.s32.totalorder %s43, 3
      %p125 = por %p123, %p124
      %p126 = scmp.ne.s32.totalorder %s115, %s116
      %p127 = scmp.eq.s32.totalorder %s43, 0
      %p128 = por %p126, %p127
      %p129 = scmp.ne.s32.totalorder %s115, %s116
      %p130 = scmp.eq.s32.totalorder %s44, 3
      %p131 = por %p129, %p130
      %p133 = scmp.ne.s32.totalorder %s116, %s132
      %p134 = scmp.eq.s32.totalorder %s44, 0
      %p135 = por %p133, %p134
      %s136 = ssub.s32 %s45, %s57
      %p137 = scmp.eq.s32.totalorder %s136, 0
      %s139 = sadd.s32 %s138, 1
      %s140 = scalar_select %p137, %s138, %s139
      %p143 = pneg %p137
      %p144 = scmp.eq.s32.totalorder %s38, 3
      %p145 = por %p143, %p144
      %p146 = scmp.ne.s32.totalorder %s138, %s141
      %p147 = scmp.eq.s32.totalorder %s38, 0
      %p148 = por %p146, %p147
      %p149 = scmp.ne.s32.totalorder %s138, %s141
      %p150 = scmp.eq.s32.totalorder %s43, 3
      %p151 = por %p149, %p150
      %p152 = scmp.ne.s32.totalorder %s141, %s142
      %p153 = scmp.eq.s32.totalorder %s43, 0
      %p154 = por %p152, %p153
      %p155 = scmp.ne.s32.totalorder %s141, %s142
      %p156 = scmp.eq.s32.totalorder %s44, 3
      %p157 = por %p155, %p156
      %p159 = scmp.ne.s32.totalorder %s142, %s158
      %p160 = scmp.eq.s32.totalorder %s44, 0
      %p161 = por %p159, %p160
      %s163 = sadd.s32 %s162, 1
      %p166 = scmp.eq.s32.totalorder %s38, 3
      %p167 = scmp.ne.s32.totalorder %s162, %s164
      %p168 = scmp.eq.s32.totalorder %s38, 0
      %p169 = por %p167, %p168
      %p170 = scmp.ne.s32.totalorder %s162, %s164
      %p171 = scmp.eq.s32.totalorder %s43, 3
      %p172 = por %p170, %p171
      %p173 = scmp.ne.s32.totalorder %s164, %s165
      %p174 = scmp.eq.s32.totalorder %s43, 0
      %p175 = por %p173, %p174
      %p176 = scmp.ne.s32.totalorder %s164, %s165
      %p177 = scmp.eq.s32.totalorder %s44, 3
      %p178 = por %p176, %p177
      %p180 = scmp.ne.s32.totalorder %s165, %s179
      %p181 = scmp.eq.s32.totalorder %s44, 0
      %p182 = por %p180, %p181
      %s184 = sadd.s32 %s183, 1
      %p187 = scmp.eq.s32.totalorder %s38, 3
      %p188 = scmp.ne.s32.totalorder %s183, %s185
      %p189 = scmp.eq.s32.totalorder %s38, 0
      %p190 = por %p188, %p189
      %p191 = scmp.ne.s32.totalorder %s183, %s185
      %p192 = scmp.eq.s32.totalorder %s43, 3
      %p193 = por %p191, %p192
      %p194 = scmp.ne.s32.totalorder %s185, %s186
      %p195 = scmp.eq.s32.totalorder %s43, 0
      %p196 = por %p194, %p195
      %p197 = scmp.ne.s32.totalorder %s185, %s186
      %p198 = scmp.eq.s32.totalorder %s44, 3
      %p199 = por %p197, %p198
      %p201 = scmp.ne.s32.totalorder %s186, %s200
      %p202 = scmp.eq.s32.totalorder %s44, 0
      %p203 = por %p201, %p202
      %s205 = sadd.s32 %s204, 1
      %p208 = scmp.eq.s32.totalorder %s38, 3
      %p209 = scmp.ne.s32.totalorder %s204, %s206
      %p210 = scmp.eq.s32.totalorder %s38, 0
      %p211 = por %p209, %p210
      %p212 = scmp.ne.s32.totalorder %s204, %s206
      %p213 = scmp.eq.s32.totalorder %s43, 3
      %p214 = por %p212, %p213
      %p215 = scmp.ne.s32.totalorder %s206, %s207
      %p216 = scmp.eq.s32.totalorder %s43, 0
      %p217 = por %p215, %p216
      %p218 = scmp.ne.s32.totalorder %s206, %s207
      %p219 = scmp.eq.s32.totalorder %s44, 3
      %p220 = por %p218, %p219
      %p222 = scmp.ne.s32.totalorder %s207, %s221
      %p223 = scmp.eq.s32.totalorder %s44, 0
      %p224 = por %p222, %p223
      %s226 = sadd.s32 %s225, 1
      %p229 = scmp.eq.s32.totalorder %s38, 3
      %p230 = scmp.ne.s32.totalorder %s225, %s227
      %p231 = scmp.eq.s32.totalorder %s38, 0
      %p232 = por %p230, %p231
      %p233 = scmp.ne.s32.totalorder %s225, %s227
      %p234 = scmp.eq.s32.totalorder %s43, 3
      %p235 = por %p233, %p234
      %p236 = scmp.ne.s32.totalorder %s227, %s228
      %p237 = scmp.eq.s32.totalorder %s43, 0
      %p238 = por %p236, %p237
      %p239 = scmp.ne.s32.totalorder %s227, %s228
      %p240 = scmp.eq.s32.totalorder %s44, 3
      %p241 = por %p239, %p240
      %p243 = scmp.ne.s32.totalorder %s228, %s242
      %p244 = scmp.eq.s32.totalorder %s44, 0
      %p245 = por %p243, %p244
      %s247 = sadd.s32 %s246, 1
      %p250 = scmp.eq.s32.totalorder %s38, 3
      %p251 = scmp.ne.s32.totalorder %s246, %s248
      %p252 = scmp.eq.s32.totalorder %s38, 0
      %p253 = por %p251, %p252
      %p254 = scmp.ne.s32.totalorder %s246, %s248
      %p255 = scmp.eq.s32.totalorder %s43, 3
      %p256 = por %p254, %p255
      %p257 = scmp.ne.s32.totalorder %s248, %s249
      %p258 = scmp.eq.s32.totalorder %s43, 0
      %p259 = por %p257, %p258
      %p260 = scmp.ne.s32.totalorder %s248, %s249
      %p261 = scmp.eq.s32.totalorder %s44, 3
      %p262 = por %p260, %p261
      %p264 = scmp.ne.s32.totalorder %s249, %s263
      %p265 = scmp.eq.s32.totalorder %s44, 0
      %p266 = por %p264, %p265
      %s268 = sadd.s32 %s267, 1
      %p271 = scmp.eq.s32.totalorder %s38, 3
      %p272 = scmp.ne.s32.totalorder %s267, %s269
      %p273 = scmp.eq.s32.totalorder %s38, 0
      %p274 = por %p272, %p273
      %p275 = scmp.ne.s32.totalorder %s267, %s269
      %p276 = scmp.eq.s32.totalorder %s43, 3
      %p277 = por %p275, %p276
      %p278 = scmp.ne.s32.totalorder %s269, %s270
      %p279 = scmp.eq.s32.totalorder %s43, 0
      %p280 = por %p278, %p279
      %p281 = scmp.ne.s32.totalorder %s269, %s270
      %p282 = scmp.eq.s32.totalorder %s44, 3
      %p283 = por %p281, %p282
      %p285 = scmp.ne.s32.totalorder %s270, %s284
      %p286 = scmp.eq.s32.totalorder %s44, 0
      %p287 = por %p285, %p286
      %s289 = sadd.s32 %s288, 1
      %p292 = scmp.eq.s32.totalorder %s38, 3
      %p293 = scmp.ne.s32.totalorder %s288, %s290
      %p294 = scmp.eq.s32.totalorder %s38, 0
      %p295 = por %p293, %p294
      %p296 = scmp.ne.s32.totalorder %s288, %s290
      %p297 = scmp.eq.s32.totalorder %s43, 3
      %p298 = por %p296, %p297
      %p299 = scmp.ne.s32.totalorder %s290, %s291
      %p300 = scmp.eq.s32.totalorder %s43, 0
      %p301 = por %p299, %p300
      %p302 = scmp.ne.s32.totalorder %s290, %s291
      %p303 = scmp.eq.s32.totalorder %s44, 3
      %p304 = por %p302, %p303
      %p306 = scmp.ne.s32.totalorder %s291, %s305
      %p307 = scmp.eq.s32.totalorder %s44, 0
      %p308 = por %p306, %p307
      %s310 = sadd.s32 %s309, 1
      %p313 = scmp.eq.s32.totalorder %s38, 3
      %p314 = scmp.ne.s32.totalorder %s309, %s311
      %p315 = scmp.eq.s32.totalorder %s38, 0
      %p316 = por %p314, %p315
      %p317 = scmp.ne.s32.totalorder %s309, %s311
      %p318 = scmp.eq.s32.totalorder %s43, 3
      %p319 = por %p317, %p318
      %p320 = scmp.ne.s32.totalorder %s311, %s312
      %p321 = scmp.eq.s32.totalorder %s43, 0
      %p322 = por %p320, %p321
      %p323 = scmp.ne.s32.totalorder %s311, %s312
      %p324 = scmp.eq.s32.totalorder %s44, 3
      %p325 = por %p323, %p324
      %p327 = scmp.ne.s32.totalorder %s312, %s326
      %p328 = scmp.eq.s32.totalorder %s44, 0
      %p329 = por %p327, %p328
      %s330 = ssub.s32 %s46, %s53
      %p331 = scmp.eq.s32.totalorder %s330, 0
      %s333 = sadd.s32 %s332, 1
      %s334 = scalar_select %p331, %s332, %s333
      %p337 = pneg %p331
      %p338 = scmp.eq.s32.totalorder %s38, 3
      %p339 = por %p337, %p338
      %p340 = scmp.ne.s32.totalorder %s332, %s335
      %p341 = scmp.eq.s32.totalorder %s38, 0
      %p342 = por %p340, %p341
      %p343 = scmp.ne.s32.totalorder %s332, %s335
      %p344 = scmp.eq.s32.totalorder %s43, 3
      %p345 = por %p343, %p344
      %p346 = scmp.ne.s32.totalorder %s335, %s336
      %p347 = scmp.eq.s32.totalorder %s43, 0
      %p348 = por %p346, %p347
      %p349 = scmp.ne.s32.totalorder %s335, %s336
      %p350 = scmp.eq.s32.totalorder %s44, 3
      %p351 = por %p349, %p350
      %p353 = scmp.ne.s32.totalorder %s336, %s352
      %p354 = scmp.eq.s32.totalorder %s44, 0
      %p355 = por %p353, %p354
      %s356 = ssub.s32 %s46, %s53
      %p357 = scmp.eq.s32.totalorder %s356, 0
      %s359 = sadd.s32 %s358, 1
      %s360 = scalar_select %p357, %s358, %s359
      %p363 = pneg %p357
      %p364 = scmp.eq.s32.totalorder %s38, 3
      %p365 = por %p363, %p364
      %p366 = scmp.ne.s32.totalorder %s358, %s361
      %p367 = scmp.eq.s32.totalorder %s38, 0
      %p368 = por %p366, %p367
      %p369 = scmp.ne.s32.totalorder %s358, %s361
      %p370 = scmp.eq.s32.totalorder %s43, 3
      %p371 = por %p369, %p370
      %p372 = scmp.ne.s32.totalorder %s361, %s362
      %p373 = scmp.eq.s32.totalorder %s43, 0
      %p374 = por %p372, %p373
      %p375 = scmp.ne.s32.totalorder %s361, %s362
      %p376 = scmp.eq.s32.totalorder %s44, 3
      %p377 = por %p375, %p376
      %p379 = scmp.ne.s32.totalorder %s362, %s378
      %p380 = scmp.eq.s32.totalorder %s44, 0
      %p381 = por %p379, %p380
      %s382 = ssub.s32 %s46, %s53
      %p383 = scmp.eq.s32.totalorder %s382, 0
      %s385 = sadd.s32 %s384, 1
      %s386 = scalar_select %p383, %s384, %s385
      %p389 = pneg %p383
      %p390 = scmp.eq.s32.totalorder %s38, 3
      %p391 = por %p389, %p390
      %p392 = scmp.ne.s32.totalorder %s384, %s387
      %p393 = scmp.eq.s32.totalorder %s38, 0
      %p394 = por %p392, %p393
      %p395 = scmp.ne.s32.totalorder %s384, %s387
      %p396 = scmp.eq.s32.totalorder %s43, 3
      %p397 = por %p395, %p396
      %p398 = scmp.ne.s32.totalorder %s387, %s388
      %p399 = scmp.eq.s32.totalorder %s43, 0
      %p400 = por %p398, %p399
      %p401 = scmp.ne.s32.totalorder %s387, %s388
      %p402 = scmp.eq.s32.totalorder %s44, 3
      %p403 = por %p401, %p402
      %p405 = scmp.ne.s32.totalorder %s388, %s404
      %p406 = scmp.eq.s32.totalorder %s44, 0
      %p407 = por %p405, %p406
      %s408 = ssub.s32 %s46, %s53
      %p409 = scmp.eq.s32.totalorder %s408, 0
      %s411 = sadd.s32 %s410, 1
      %s412 = scalar_select %p409, %s410, %s411
      %p415 = pneg %p409
      %p416 = scmp.eq.s32.totalorder %s38, 3
      %p417 = por %p415, %p416
      %p418 = scmp.ne.s32.totalorder %s410, %s413
      %p419 = scmp.eq.s32.totalorder %s38, 0
      %p420 = por %p418, %p419
      %p421 = scmp.ne.s32.totalorder %s410, %s413
      %p422 = scmp.eq.s32.totalorder %s43, 3
      %p423 = por %p421, %p422
      %p424 = scmp.ne.s32.totalorder %s413, %s414
      %p425 = scmp.eq.s32.totalorder %s43, 0
      %p426 = por %p424, %p425
      %p427 = scmp.ne.s32.totalorder %s413, %s414
      %p428 = scmp.eq.s32.totalorder %s44, 3
      %p429 = por %p427, %p428
      %p431 = scmp.ne.s32.totalorder %s414, %s430
      %p432 = scmp.eq.s32.totalorder %s44, 0
      %p433 = por %p431, %p432
      %s434 = ssub.s32 %s45, %s57
      %s435 = ssub.s32 %s46, %s53
      %s436 = sor.u32 %s434, %s435
      %p437 = scmp.eq.s32.totalorder %s436, 0
      %s439 = sadd.s32 %s438, 1
      %s440 = scalar_select %p437, %s438, %s439
      %p443 = pneg %p437
      %p444 = scmp.eq.s32.totalorder %s38, 3
      %p445 = por %p443, %p444
      %p446 = scmp.ne.s32.totalorder %s438, %s441
      %p447 = scmp.eq.s32.totalorder %s38, 0
      %p448 = por %p446, %p447
      %p449 = scmp.ne.s32.totalorder %s438, %s441
      %p450 = scmp.eq.s32.totalorder %s43, 3
      %p451 = por %p449, %p450
      %p452 = scmp.ne.s32.totalorder %s441, %s442
      %p453 = scmp.eq.s32.totalorder %s43, 0
      %p454 = por %p452, %p453
      %p455 = scmp.ne.s32.totalorder %s441, %s442
      %p456 = scmp.eq.s32.totalorder %s44, 3
      %p457 = por %p455, %p456
      %p459 = scmp.ne.s32.totalorder %s442, %s458
      %p460 = scmp.eq.s32.totalorder %s44, 0
      %p461 = por %p459, %p460
      %s462 = ssub.s32 %s45, %s57
      %p463 = scmp.eq.s32.totalorder %s462, 0
      %s465 = sadd.s32 %s464, 1
      %s466 = scalar_select %p463, %s464, %s465
      %p469 = pneg %p463
      %p470 = scmp.eq.s32.totalorder %s38, 3
      %p471 = por %p469, %p470
      %p472 = scmp.ne.s32.totalorder %s464, %s467
      %p473 = scmp.eq.s32.totalorder %s38, 0
      %p474 = por %p472, %p473
      %p475 = scmp.ne.s32.totalorder %s464, %s467
      %p476 = scmp.eq.s32.totalorder %s43, 3
      %p477 = por %p475, %p476
      %p478 = scmp.ne.s32.totalorder %s467, %s468
      %p479 = scmp.eq.s32.totalorder %s43, 0
      %p480 = por %p478, %p479
      %p481 = scmp.ne.s32.totalorder %s467, %s468
      %p482 = scmp.eq.s32.totalorder %s44, 3
      %p483 = por %p481, %p482
      %p485 = scmp.ne.s32.totalorder %s468, %s484
      %p486 = scmp.eq.s32.totalorder %s44, 0
      %p487 = por %p485, %p486
      %p488 = scmp.le.s32.totalorder 1, %s38
      %p489 = scmp.lt.s32.totalorder %s38, 5
      %p490 = pnand %p488, %p489
      %p491 = pneg %p490
      // Predicated region
      $region9: #{tpu_custom_call.1} parent=5 // pred_check
        _
      $region10: #{tpu_custom_call.1} parent=5 // pred_check_branch
        %493 = sbr.rel (%p490) target = $region12
      $region11: #{tpu_custom_call.1} parent=5 // pred_region
        %s494 = ssub.s32 %s38, 1
        // Predicated region
        $region13: #{tpu_custom_call.1} parent=11 // pred_check
          %p495 = pneg %p76
        $region14: #{tpu_custom_call.1} parent=11 // pred_check_branch
          %497 = sbr.rel (%p495) target = $region16
        $region15: #{tpu_custom_call.1} parent=11 // pred_region
          %s498 = smul.u32 2, %s47
          %500 = vsyncadd [#allocation5], 0
          %s501 = smul.addr %s498, 8
          %s502 = scalar_lea.hbm %s0, %s501
          %s503 = sshll.u32 %s502, 4
          %s504 = int_to_ptr.hbm [resolvable:$true] %s503
          %s505 = sshll.u32 [#allocation4], 4
          %s506 = int_to_ptr.vmem [resolvable:$true] %s505
          %511 = dma.hbm_to_vmem [thread:$0]  %s504, 256, %s506, [#allocation5], 128, 128, 8
        $region16: #{tpu_custom_call.1} parent=11 // pred_fallthru
          _
        // Predicated region
        $region17: #{tpu_custom_call.1} parent=11 // pred_check
          %p512 = pneg %p102
        $region18: #{tpu_custom_call.1} parent=11 // pred_check_branch
          %514 = sbr.rel (%p512) target = $region20
        $region19: #{tpu_custom_call.1} parent=11 // pred_region
          %s515 = smul.u32 2, %s47
          %517 = vsyncadd [#allocation8], 0
          %s518 = smul.addr %s515, 8
          %s519 = scalar_lea.hbm %s1, %s518
          %s520 = sshll.u32 %s519, 4
          %s521 = int_to_ptr.hbm [resolvable:$true] %s520
          %s522 = sshll.u32 [#allocation7], 4
          %s523 = int_to_ptr.vmem [resolvable:$true] %s522
          %528 = dma.hbm_to_vmem [thread:$0]  %s521, 256, %s523, [#allocation8], 128, 128, 8
        $region20: #{tpu_custom_call.1} parent=11 // pred_fallthru
          _
        // Predicated region
        $region21: #{tpu_custom_call.1} parent=11 // pred_check
          %p529 = pneg %p128
        $region22: #{tpu_custom_call.1} parent=11 // pred_check_branch
          %531 = sbr.rel (%p529) target = $region24
        $region23: #{tpu_custom_call.1} parent=11 // pred_region
          %s532 = smul.u32 16, %s47
          %p533 = scmp.lt.s32.totalorder %s532, 15
          %s534 = scalar_select %p533, %s532, 15
          %s535 = smul.addr %s534, 8
          %s536 = scalar_lea.vmem %s2, %s535
          %s537 = smul.u32 16, %s47
        $region24: #{tpu_custom_call.1} parent=11 // pred_fallthru
          _
        // Predicated region
        $region25: #{tpu_custom_call.1} parent=11 // pred_check
          %p538 = pneg %p154
        $region26: #{tpu_custom_call.1} parent=11 // pred_check_branch
          %540 = sbr.rel (%p538) target = $region28
        $region27: #{tpu_custom_call.1} parent=11 // pred_region
          %s541 = smul.u32 16, %s47
          %543 = vsyncadd [#allocation8], 0
          %s544 = smul.addr %s541, 8
          %s545 = scalar_lea.hbm %s3, %s544
          %s546 = sshll.u32 %s545, 4
          %s547 = int_to_ptr.hbm [resolvable:$true] %s546
          %s548 = sshll.u32 [#allocation9], 4
          %s549 = int_to_ptr.vmem [resolvable:$true] %s548
          %554 = dma.hbm_to_vmem [thread:$0]  %s547, 2048, %s549, [#allocation8], 128, 128, 8
        $region28: #{tpu_custom_call.1} parent=11 // pred_fallthru
          _
        // Predicated region
        $region29: #{tpu_custom_call.1} parent=11 // pred_check
          %p555 = pneg %p175
        $region30: #{tpu_custom_call.1} parent=11 // pred_check_branch
          %557 = sbr.rel (%p555) target = $region32
        $region31: #{tpu_custom_call.1} parent=11 // pred_region
          %559 = vsyncadd [#allocation11], 0
          %s560 = sshll.u32 %s4, 4
          %s561 = int_to_ptr.hbm [resolvable:$true] %s560
          %s562 = sshll.u32 [#allocation10], 4
          %s563 = int_to_ptr.vmem [resolvable:$true] %s562
          %568 = dma.hbm_to_vmem [thread:$0]  %s561, 256, %s563, [#allocation11], 64, 64, 4
        $region32: #{tpu_custom_call.1} parent=11 // pred_fallthru
          _
        // Predicated region
        $region33: #{tpu_custom_call.1} parent=11 // pred_check
          %p569 = pneg %p196
        $region34: #{tpu_custom_call.1} parent=11 // pred_check_branch
          %571 = sbr.rel (%p569) target = $region36
        $region35: #{tpu_custom_call.1} parent=11 // pred_region
          _
        $region36: #{tpu_custom_call.1} parent=11 // pred_fallthru
          _
        // Predicated region
        $region37: #{tpu_custom_call.1} parent=11 // pred_check
          %p572 = pneg %p217
        $region38: #{tpu_custom_call.1} parent=11 // pred_check_branch
          %574 = sbr.rel (%p572) target = $region40
        $region39: #{tpu_custom_call.1} parent=11 // pred_region
          %576 = vsyncadd [#allocation11], 0
          %s578 = sshll.u32 %s6, 4
          %s579 = int_to_ptr.hbm [resolvable:$true] %s578
          %s580 = sshll.u32 [#allocation12], 4
          %s581 = int_to_ptr.vmem [resolvable:$true] %s580
          %583 = dma.hbm_to_vmem [thread:$0]  %s579, 16, %s581, [#allocation11]
        $region40: #{tpu_custom_call.1} parent=11 // pred_fallthru
          _
        // Predicated region
        $region41: #{tpu_custom_call.1} parent=11 // pred_check
          %p584 = pneg %p238
        $region42: #{tpu_custom_call.1} parent=11 // pred_check_branch
          %586 = sbr.rel (%p584) target = $region44
        $region43: #{tpu_custom_call.1} parent=11 // pred_region
          _
        $region44: #{tpu_custom_call.1} parent=11 // pred_fallthru
          _
        // Predicated region
        $region45: #{tpu_custom_call.1} parent=11 // pred_check
          %p587 = pneg %p259
        $region46: #{tpu_custom_call.1} parent=11 // pred_check_branch
          %589 = sbr.rel (%p587) target = $region48
        $region47: #{tpu_custom_call.1} parent=11 // pred_region
          _
        $region48: #{tpu_custom_call.1} parent=11 // pred_fallthru
          _
        // Predicated region
        $region49: #{tpu_custom_call.1} parent=11 // pred_check
          %p590 = pneg %p280
        $region50: #{tpu_custom_call.1} parent=11 // pred_check_branch
          %592 = sbr.rel (%p590) target = $region52
        $region51: #{tpu_custom_call.1} parent=11 // pred_region
          _
        $region52: #{tpu_custom_call.1} parent=11 // pred_fallthru
          _
        // Predicated region
        $region53: #{tpu_custom_call.1} parent=11 // pred_check
          %p593 = pneg %p301
        $region54: #{tpu_custom_call.1} parent=11 // pred_check_branch
          %595 = sbr.rel (%p593) target = $region56
        $region55: #{tpu_custom_call.1} parent=11 // pred_region
          %597 = vsyncadd [#allocation14], 0
          %s598 = sshll.u32 %s10, 4
          %s599 = int_to_ptr.hbm [resolvable:$true] %s598
          %s600 = sshll.u32 [#allocation13], 4
          %s601 = int_to_ptr.vmem [resolvable:$true] %s600
          %606 = dma.hbm_to_vmem [thread:$0]  %s599, 768, %s601, [#allocation14], 64, 64, 4
        $region56: #{tpu_custom_call.1} parent=11 // pred_fallthru
          _
        // Predicated region
        $region57: #{tpu_custom_call.1} parent=11 // pred_check
          %p607 = pneg %p322
        $region58: #{tpu_custom_call.1} parent=11 // pred_check_branch
          %609 = sbr.rel (%p607) target = $region60
        $region59: #{tpu_custom_call.1} parent=11 // pred_region
          %611 = vsyncadd [#allocation14], 0
          %s612 = sshll.u32 %s11, 4
          %s613 = int_to_ptr.hbm [resolvable:$true] %s612
          %s614 = sshll.u32 [#allocation15], 4
          %s615 = int_to_ptr.vmem [resolvable:$true] %s614
          %620 = dma.hbm_to_vmem [thread:$0]  %s613, 48, %s615, [#allocation14], 16, 16, 1
        $region60: #{tpu_custom_call.1} parent=11 // pred_fallthru
          _
      $region12: #{tpu_custom_call.1} parent=5 // pred_fallthru
        _
      %p621 = scmp.lt.s32.totalorder %s38, 4
      // Predicated region
      $region61: #{tpu_custom_call.1} parent=5 // pred_check
        %p622 = pneg %p621
      $region62: #{tpu_custom_call.1} parent=5 // pred_check_branch
        %624 = sbr.rel (%p622) target = $region64
      $region63: #{tpu_custom_call.1} parent=5 // pred_region
        // Predicated region
        $region65: #{tpu_custom_call.1} parent=63 // pred_check
          %p625 = pneg %p342
        $region66: #{tpu_custom_call.1} parent=63 // pred_check_branch
          %627 = sbr.rel (%p625) target = $region68
        $region67: #{tpu_custom_call.1} parent=63 // pred_region
          %s628 = sand.u32 %s38, 1
          %s629 = scalar_lea.sflag [#allocation17], %s628
          %s630 = sand.u32 %s332, 1
          %s631 = smul.addr %s630, 32
          %s632 = scalar_lea.vmem [#allocation16], %s631
          %s633 = smul.u32 2, %s46
          %635 = vsyncadd %s629, 0
          %s636 = smul.addr %s633, 4
          %s637 = scalar_lea.hbm %s12, %s636
          %s638 = sshll.u32 %s637, 4
          %s639 = int_to_ptr.hbm [resolvable:$true] %s638
          %s640 = sshll.u32 %s632, 4
          %s641 = int_to_ptr.vmem [resolvable:$true] %s640
          %646 = dma.hbm_to_vmem [thread:$0]  %s639, 512, %s641, %s629, 512, 128, 8
        $region68: #{tpu_custom_call.1} parent=63 // pred_fallthru
          _
        // Predicated region
        $region69: #{tpu_custom_call.1} parent=63 // pred_check
          %p647 = pneg %p368
        $region70: #{tpu_custom_call.1} parent=63 // pred_check_branch
          %649 = sbr.rel (%p647) target = $region72
        $region71: #{tpu_custom_call.1} parent=63 // pred_region
          %s650 = sand.u32 %s38, 1
          %s651 = scalar_lea.sflag [#allocation17], %s650
          %s652 = sand.u32 %s358, 1
          %s653 = smul.addr %s652, 64
          %s654 = scalar_lea.vmem [#allocation18], %s653
          %s655 = smul.u32 2, %s46
          %657 = vsyncadd %s651, 0
          %s658 = smul.addr %s655, 4
          %s659 = scalar_lea.hbm %s13, %s658
          %s660 = sshll.u32 %s659, 4
          %s661 = int_to_ptr.hbm [resolvable:$true] %s660
          %s662 = sshll.u32 %s654, 4
          %s663 = int_to_ptr.vmem [resolvable:$true] %s662
          %668 = dma.hbm_to_vmem [thread:$0]  %s661, 1024, %s663, %s651, 512, 128, 8
        $region72: #{tpu_custom_call.1} parent=63 // pred_fallthru
          _
        // Predicated region
        $region73: #{tpu_custom_call.1} parent=63 // pred_check
          %p669 = pneg %p394
        $region74: #{tpu_custom_call.1} parent=63 // pred_check_branch
          %671 = sbr.rel (%p669) target = $region76
        $region75: #{tpu_custom_call.1} parent=63 // pred_region
          %s672 = sand.u32 %s384, 1
          %s673 = scalar_lea.sflag [#allocation20], %s672
          %s674 = sand.u32 %s384, 1
          %s675 = smul.addr %s674, 32
          %s676 = scalar_lea.vmem [#allocation19], %s675
          %s677 = smul.u32 2, %s46
          %679 = vsyncadd %s673, 0
          %s680 = smul.addr %s677, 4
          %s681 = scalar_lea.hbm %s14, %s680
          %s682 = sshll.u32 %s681, 4
          %s683 = int_to_ptr.hbm [resolvable:$true] %s682
          %s684 = sshll.u32 %s676, 4
          %s685 = int_to_ptr.vmem [resolvable:$true] %s684
          %690 = dma.hbm_to_vmem [thread:$0]  %s683, 512, %s685, %s673, 512, 128, 8
        $region76: #{tpu_custom_call.1} parent=63 // pred_fallthru
          _
        // Predicated region
        $region77: #{tpu_custom_call.1} parent=63 // pred_check
          %p691 = pneg %p420
        $region78: #{tpu_custom_call.1} parent=63 // pred_check_branch
          %693 = sbr.rel (%p691) target = $region80
        $region79: #{tpu_custom_call.1} parent=63 // pred_region
          %s694 = smul.u32 2, %s46
          %p695 = scmp.lt.s32.totalorder %s694, 7
          %s696 = scalar_select %p695, %s694, 7
          %s697 = scalar_lea.vmem %s15, %s696
          %s698 = smul.u32 2, %s46
        $region80: #{tpu_custom_call.1} parent=63 // pred_fallthru
          _
      $region64: #{tpu_custom_call.1} parent=5 // pred_fallthru
        _
      %p699 = scmp.le.s32.totalorder 1, %s38
      %p700 = scmp.lt.s32.totalorder %s38, 5
      %p701 = pnand %p699, %p700
      %p702 = pneg %p701
      // Predicated region
      $region81: #{tpu_custom_call.1} parent=5 // pred_check
        _
      $region82: #{tpu_custom_call.1} parent=5 // pred_check_branch
        %704 = sbr.rel (%p701) target = $region84
      $region83: #{tpu_custom_call.1} parent=5 // pred_region
        %s705 = ssub.s32 %s38, 1
        // Predicated region
        $region85: #{tpu_custom_call.1} parent=83 // pred_check
          %p706 = pneg %p76
        $region86: #{tpu_custom_call.1} parent=83 // pred_check_branch
          %708 = sbr.rel (%p706) target = $region88
        $region87: #{tpu_custom_call.1} parent=83 // pred_region
          %710 = dma.done [#allocation5], 256
        $region88: #{tpu_custom_call.1} parent=83 // pred_fallthru
          _
        // Predicated region
        $region89: #{tpu_custom_call.1} parent=83 // pred_check
          %p711 = pneg %p102
        $region90: #{tpu_custom_call.1} parent=83 // pred_check_branch
          %713 = sbr.rel (%p711) target = $region92
        $region91: #{tpu_custom_call.1} parent=83 // pred_region
          %715 = dma.done [#allocation8], 256
        $region92: #{tpu_custom_call.1} parent=83 // pred_fallthru
          _
        // Predicated region
        $region93: #{tpu_custom_call.1} parent=83 // pred_check
          %p716 = pneg %p154
        $region94: #{tpu_custom_call.1} parent=83 // pred_check_branch
          %718 = sbr.rel (%p716) target = $region96
        $region95: #{tpu_custom_call.1} parent=83 // pred_region
          %720 = dma.done [#allocation8], 2048
        $region96: #{tpu_custom_call.1} parent=83 // pred_fallthru
          _
        // Predicated region
        $region97: #{tpu_custom_call.1} parent=83 // pred_check
          %p721 = pneg %p175
        $region98: #{tpu_custom_call.1} parent=83 // pred_check_branch
          %723 = sbr.rel (%p721) target = $region100
        $region99: #{tpu_custom_call.1} parent=83 // pred_region
          %725 = dma.done [#allocation11], 256
        $region100: #{tpu_custom_call.1} parent=83 // pred_fallthru
          _
        // Predicated region
        $region101: #{tpu_custom_call.1} parent=83 // pred_check
          %p726 = pneg %p217
        $region102: #{tpu_custom_call.1} parent=83 // pred_check_branch
          %728 = sbr.rel (%p726) target = $region104
        $region103: #{tpu_custom_call.1} parent=83 // pred_region
          %730 = dma.done [#allocation11], 16
        $region104: #{tpu_custom_call.1} parent=83 // pred_fallthru
          _
        // Predicated region
        $region105: #{tpu_custom_call.1} parent=83 // pred_check
          %p731 = pneg %p301
        $region106: #{tpu_custom_call.1} parent=83 // pred_check_branch
          %733 = sbr.rel (%p731) target = $region108
        $region107: #{tpu_custom_call.1} parent=83 // pred_region
          %735 = dma.done [#allocation14], 768
        $region108: #{tpu_custom_call.1} parent=83 // pred_fallthru
          _
        // Predicated region
        $region109: #{tpu_custom_call.1} parent=83 // pred_check
          %p736 = pneg %p322
        $region110: #{tpu_custom_call.1} parent=83 // pred_check_branch
          %738 = sbr.rel (%p736) target = $region112
        $region111: #{tpu_custom_call.1} parent=83 // pred_region
          %740 = dma.done [#allocation14], 48
        $region112: #{tpu_custom_call.1} parent=83 // pred_fallthru
          _
        %s741 = sand.u32 %s43, 1
        %s742 = scalar_lea.sflag [#allocation17], %s741
        %s743 = sand.u32 %s335, 1
        %s744 = smul.addr %s743, 32
        %s745 = scalar_lea.vmem [#allocation16], %s744
        // Predicated region
        $region113: #{tpu_custom_call.1} parent=83 // pred_check
          %p746 = pneg %p348
        $region114: #{tpu_custom_call.1} parent=83 // pred_check_branch
          %748 = sbr.rel (%p746) target = $region116
        $region115: #{tpu_custom_call.1} parent=83 // pred_region
          %750 = dma.done %s742, 512
        $region116: #{tpu_custom_call.1} parent=83 // pred_fallthru
          _
        %s751 = sand.u32 %s43, 1
        %s752 = scalar_lea.sflag [#allocation17], %s751
        %s753 = sand.u32 %s361, 1
        %s754 = smul.addr %s753, 64
        %s755 = scalar_lea.vmem [#allocation18], %s754
        // Predicated region
        $region117: #{tpu_custom_call.1} parent=83 // pred_check
          %p756 = pneg %p374
        $region118: #{tpu_custom_call.1} parent=83 // pred_check_branch
          %758 = sbr.rel (%p756) target = $region120
        $region119: #{tpu_custom_call.1} parent=83 // pred_region
          %760 = dma.done %s752, 1024
        $region120: #{tpu_custom_call.1} parent=83 // pred_fallthru
          _
        %s761 = sand.u32 %s387, 1
        %s762 = scalar_lea.sflag [#allocation20], %s761
        %s763 = sand.u32 %s387, 1
        %s764 = smul.addr %s763, 32
        %s765 = scalar_lea.vmem [#allocation19], %s764
        // Predicated region
        $region121: #{tpu_custom_call.1} parent=83 // pred_check
          %p766 = pneg %p400
        $region122: #{tpu_custom_call.1} parent=83 // pred_check_branch
          %768 = sbr.rel (%p766) target = $region124
        $region123: #{tpu_custom_call.1} parent=83 // pred_region
          %770 = dma.done %s762, 512
        $region124: #{tpu_custom_call.1} parent=83 // pred_fallthru
          _
        %p771 = pneg %p76
        %p772 = pneg %p73
        %p773 = pneg %p102
        %p774 = pneg %p99
        %s775 = smul.u32 16, %s47
        %p776 = scmp.lt.s32.totalorder %s775, 15
        %s777 = scalar_select %p776, %s775, 15
        %s778 = smul.addr %s777, 8
        %s779 = scalar_lea.vmem %s2, %s778
        %p780 = pneg %p128
        %p781 = pneg %p125
        %p782 = pneg %p154
        %p783 = pneg %p151
        %p784 = pneg %p175
        %p785 = pneg %p172
        %p786 = pneg %p196
        %p787 = pneg %p193
        %p788 = pneg %p217
        %p789 = pneg %p214
        %p790 = pneg %p238
        %p791 = pneg %p235
        %p792 = pneg %p259
        %p793 = pneg %p256
        %p794 = pneg %p280
        %p795 = pneg %p277
        %p796 = pneg %p301
        %p797 = pneg %p298
        %p798 = pneg %p322
        %p799 = pneg %p319
        %s800 = sand.u32 %s43, 1
        %s801 = scalar_lea.sflag [#allocation17], %s800
        %s802 = sand.u32 %s335, 1
        %s803 = smul.addr %s802, 32
        %s804 = scalar_lea.vmem [#allocation16], %s803
        %p805 = pneg %p348
        %p806 = pneg %p345
        %s807 = sand.u32 %s43, 1
        %s808 = scalar_lea.sflag [#allocation17], %s807
        %s809 = sand.u32 %s361, 1
        %s810 = smul.addr %s809, 64
        %s811 = scalar_lea.vmem [#allocation18], %s810
        %p812 = pneg %p374
        %p813 = pneg %p371
        %s814 = sand.u32 %s387, 1
        %s815 = scalar_lea.sflag [#allocation20], %s814
        %s816 = sand.u32 %s387, 1
        %s817 = smul.addr %s816, 32
        %s818 = scalar_lea.vmem [#allocation19], %s817
        %p819 = pneg %p400
        %p820 = pneg %p397
        %s821 = smul.u32 2, %s48
        %p822 = scmp.lt.s32.totalorder %s821, 7
        %s823 = scalar_select %p822, %s821, 7
        %s824 = scalar_lea.vmem %s15, %s823
        %p825 = pneg %p426
        %p826 = pneg %p423
        %p827 = pneg %p454
        %p828 = pneg %p451
        %s829 = sand.u32 %s441, 1
        %s830 = scalar_lea.sflag [#allocation6], %s829
        %s831 = sand.u32 %s441, 1
        %s832 = smul.addr %s831, 32
        %s833 = scalar_lea.vmem [#allocation21], %s832
        %p834 = pneg %p480
        %p835 = pneg %p477
        %s836 = smul.u32 2, %s47
        %s837 = smul.u32 2, %s47
        %s838 = smul.u32 16, %s47
        %p839 = scmp.lt.s32.totalorder %s838, 15
        %s840 = scalar_select %p839, %s838, 15
        %s841 = smul.addr %s840, 8
        %s842 = scalar_lea.vmem %s2, %s841
        %s843 = smul.u32 16, %s47
        %s844 = smul.u32 16, %s47
        %s845 = smul.u32 2, %s48
        %s846 = smul.u32 2, %s48
        %s847 = smul.u32 2, %s48
        %s848 = smul.u32 2, %s48
        %p849 = scmp.lt.s32.totalorder %s848, 7
        %s850 = scalar_select %p849, %s848, 7
        %s851 = scalar_lea.vmem %s15, %s850
        %s852 = smul.u32 2, %s48
        %s853 = smul.u32 2, %s47
        %s854 = smul.u32 2, %s48
        %s855 = smul.u32 2, %s47
        %p857 = scmp.eq.s32.totalorder %s48, 0
        // Predicated region
        $region125: #{tpu_custom_call.1} parent=83 // pred_check
          %p858 = pneg %p857
        $region126: #{tpu_custom_call.1} parent=83 // pred_check_branch
          %860 = sbr.rel (%p858) target = $region128
        $region127: #{tpu_custom_call.1} parent=83 // pred_region
          %v861 = vld [vmem:[#allocation4] sm:$0xff]
          %v862 = vld [vmem:[#allocation4 + $0x8] sm:$0xff]
          %v863 = vld [vmem:[#allocation7] sm:$0xff]
          %v864 = vld [vmem:[#allocation7 + $0x8] sm:$0xff]
          %v865 = vld [vmem:[%s842] sm:$0xff]
          %v866 = vld [vmem:[%s842 + $0x8] sm:$0xff]
          %v867 = vld [vmem:[%s842 + $0x10] sm:$0xff]
          %v868 = vld [vmem:[%s842 + $0x18] sm:$0xff]
          %v869 = vld [vmem:[%s842 + $0x20] sm:$0xff]
          %v870 = vld [vmem:[%s842 + $0x28] sm:$0xff]
          %v871 = vld [vmem:[%s842 + $0x30] sm:$0xff]
          %v872 = vld [vmem:[%s842 + $0x38] sm:$0xff]
          %v873 = vld [vmem:[%s842 + $0x40] sm:$0xff]
          %v874 = vld [vmem:[%s842 + $0x48] sm:$0xff]
          %v875 = vld [vmem:[%s842 + $0x50] sm:$0xff]
          %v876 = vld [vmem:[%s842 + $0x58] sm:$0xff]
          %v877 = vld [vmem:[%s842 + $0x60] sm:$0xff]
          %v878 = vld [vmem:[%s842 + $0x68] sm:$0xff]
          %v879 = vld [vmem:[%s842 + $0x70] sm:$0xff]
          %v880 = vld [vmem:[%s842 + $0x78] sm:$0xff]
          %v881 = vld [vmem:[#allocation9] sm:$0xff]
          %v882 = vld [vmem:[#allocation9 + $0x8] sm:$0xff]
          %v883 = vld [vmem:[#allocation9 + $0x10] sm:$0xff]
          %v884 = vld [vmem:[#allocation9 + $0x18] sm:$0xff]
          %v885 = vld [vmem:[#allocation9 + $0x20] sm:$0xff]
          %v886 = vld [vmem:[#allocation9 + $0x28] sm:$0xff]
          %v887 = vld [vmem:[#allocation9 + $0x30] sm:$0xff]
          %v888 = vld [vmem:[#allocation9 + $0x38] sm:$0xff]
          %v889 = vld [vmem:[#allocation9 + $0x40] sm:$0xff]
          %v890 = vld [vmem:[#allocation9 + $0x48] sm:$0xff]
          %v891 = vld [vmem:[#allocation9 + $0x50] sm:$0xff]
          %v892 = vld [vmem:[#allocation9 + $0x58] sm:$0xff]
          %v893 = vld [vmem:[#allocation9 + $0x60] sm:$0xff]
          %v894 = vld [vmem:[#allocation9 + $0x68] sm:$0xff]
          %v895 = vld [vmem:[#allocation9 + $0x70] sm:$0xff]
          %v896 = vld [vmem:[#allocation9 + $0x78] sm:$0xff]
          %v897 = vpack.c.bf16 %v864, %v863
          %v898 = vld [vmem:[#allocation10] sm:$0xf]
          %v899 = vld [vmem:[#allocation10 + $0x4] sm:$0xf]
          %v900 = vld [vmem:[#allocation10 + $0x8] sm:$0xf]
          %v901 = vld [vmem:[#allocation10 + $0xc] sm:$0xf]
          %v902 = vld [vmem:[%s5] sm:$0x1]
          %v904 = vperm.slane %v902, 0
          %v910 = vunpack.c.l.b16 %v898
          %v911 = vunpack.c.l.b16 %v899
          %v912 = vunpack.c.l.b16 %v900
          %v913 = vunpack.c.l.b16 %v901
          %v914 = vpack.c.b16 %v911, %v910
          %v915 = vpack.c.b16 %v913, %v912
          %vm918 = vcmask 261120
          %v920 = vsel %vm918, %v897, 0
          %922 = vmatpush.bf16.msra.mxu0 0
          %923 = vmatpush.bf16.msra.mxu0 0
          %924 = vmatpush.bf16.msra.mxu0 0
          %925 = vmatpush.bf16.msra.mxu0 0
          %926 = vmatpush.bf16.msra.mxu0 0
          %927 = vmatpush.bf16.msra.mxu0 0
          %928 = vmatpush.bf16.msra.mxu0 %v915
          %929 = vmatpush.bf16.msra.mxu0 %v914
          %930 = vmatmul.bf16.gmra.mxu0 %v920
          %v931 = vpop.f32.mrf.mxu0
          %v932 = vadd.f32 %v904, %v931
          %v933 = vpop.f32.mrf.mxu0
          %v934 = vadd.f32 %v904, %v933
          %935 = vdwg.mxu0
          %v938 = vrot.slane %v932, 1
          %v939 = vrot.slane %v932, 2
          %v940 = vrot.slane %v932, 3
          %v941 = vrot.slane %v932, 4
          %v942 = vrot.slane %v932, 5
          %v943 = vrot.slane %v932, 6
          %v944 = vrot.slane %v932, 7
          %v945 = vrot.slane %v934, 1
          %v946 = vrot.slane %v934, 2
          %v947 = vrot.slane %v934, 3
          %v948 = vrot.slane %v934, 4
          %v949 = vrot.slane %v934, 5
          %v950 = vrot.slane %v934, 6
          %v951 = vrot.slane %v934, 7
          %v952 = vperm.slane %v932, 0
          %v953 = vperm.slane %v938, 0
          %v954 = vperm.slane %v939, 0
          %v955 = vperm.slane %v940, 0
          %v956 = vperm.slane %v941, 0
          %v957 = vperm.slane %v942, 0
          %v958 = vperm.slane %v943, 0
          %v959 = vperm.slane %v944, 0
          %v960 = vperm.slane %v934, 0
          %v961 = vperm.slane %v945, 0
          %v962 = vperm.slane %v946, 0
          %v963 = vperm.slane %v947, 0
          %v964 = vperm.slane %v948, 0
          %v965 = vperm.slane %v949, 0
          %v966 = vperm.slane %v950, 0
          %v967 = vperm.slane %v951, 0
          %v984 = vadd.f32 %v881, %v952
          %v985 = vadd.f32 %v882, %v953
          %v986 = vadd.f32 %v883, %v954
          %v987 = vadd.f32 %v884, %v955
          %v988 = vadd.f32 %v885, %v956
          %v989 = vadd.f32 %v886, %v957
          %v990 = vadd.f32 %v887, %v958
          %v991 = vadd.f32 %v888, %v959
          %v992 = vadd.f32 %v889, %v960
          %v993 = vadd.f32 %v890, %v961
          %v994 = vadd.f32 %v891, %v962
          %v995 = vadd.f32 %v892, %v963
          %v996 = vadd.f32 %v893, %v964
          %v997 = vadd.f32 %v894, %v965
          %v998 = vadd.f32 %v895, %v966
          %v999 = vadd.f32 %v896, %v967
          %v1000 = vtanh.pop %v984
          %v1001 = vtanh.pop %v985
          %v1002 = vtanh.pop %v986
          %v1003 = vtanh.pop %v987
          %v1004 = vtanh.pop %v988
          %v1005 = vtanh.pop %v989
          %v1006 = vtanh.pop %v990
          %v1007 = vtanh.pop %v991
          %v1008 = vtanh.pop %v992
          %v1009 = vtanh.pop %v993
          %v1010 = vtanh.pop %v994
          %v1011 = vtanh.pop %v995
          %v1012 = vtanh.pop %v996
          %v1013 = vtanh.pop %v997
          %v1014 = vtanh.pop %v998
          %v1015 = vtanh.pop %v999
          %v1016 = vld [vmem:[#allocation12] sm:$0x1]
          %v1018 = vperm.slane %v1016, 0
          %v1020 = vmul.f32 %v1000, %v1018
          %v1021 = vmul.f32 %v1001, %v1018
          %v1022 = vmul.f32 %v1002, %v1018
          %v1023 = vmul.f32 %v1003, %v1018
          %v1024 = vmul.f32 %v1004, %v1018
          %v1025 = vmul.f32 %v1005, %v1018
          %v1026 = vmul.f32 %v1006, %v1018
          %v1027 = vmul.f32 %v1007, %v1018
          %v1028 = vmul.f32 %v1008, %v1018
          %v1029 = vmul.f32 %v1009, %v1018
          %v1030 = vmul.f32 %v1010, %v1018
          %v1031 = vmul.f32 %v1011, %v1018
          %v1032 = vmul.f32 %v1012, %v1018
          %v1033 = vmul.f32 %v1013, %v1018
          %v1034 = vmul.f32 %v1014, %v1018
          %v1035 = vmul.f32 %v1015, %v1018
          %v1036 = vsel %vm918, %v1020, 0.0
          %1037 = vadd.xlane.f32.xlu0 %v1036
          %v1038 = vpop.xlane.xlu0 %1037
          %v1039 = vsel %vm918, %v1021, 0.0
          %1040 = vadd.xlane.f32.xlu0 %v1039
          %v1041 = vpop.xlane.xlu0 %1040
          %v1042 = vsel %vm918, %v1022, 0.0
          %1043 = vadd.xlane.f32.xlu0 %v1042
          %v1044 = vpop.xlane.xlu0 %1043
          %v1045 = vsel %vm918, %v1023, 0.0
          %1046 = vadd.xlane.f32.xlu0 %v1045
          %v1047 = vpop.xlane.xlu0 %1046
          %v1048 = vsel %vm918, %v1024, 0.0
          %1049 = vadd.xlane.f32.xlu0 %v1048
          %v1050 = vpop.xlane.xlu0 %1049
          %v1051 = vsel %vm918, %v1025, 0.0
          %1052 = vadd.xlane.f32.xlu0 %v1051
          %v1053 = vpop.xlane.xlu0 %1052
          %v1054 = vsel %vm918, %v1026, 0.0
          %1055 = vadd.xlane.f32.xlu0 %v1054
          %v1056 = vpop.xlane.xlu0 %1055
          %v1057 = vsel %vm918, %v1027, 0.0
          %1058 = vadd.xlane.f32.xlu0 %v1057
          %v1059 = vpop.xlane.xlu0 %1058
          %v1060 = vsel %vm918, %v1028, 0.0
          %1061 = vadd.xlane.f32.xlu0 %v1060
          %v1062 = vpop.xlane.xlu0 %1061
          %v1063 = vsel %vm918, %v1029, 0.0
          %1064 = vadd.xlane.f32.xlu0 %v1063
          %v1065 = vpop.xlane.xlu0 %1064
          %v1066 = vsel %vm918, %v1030, 0.0
          %1067 = vadd.xlane.f32.xlu0 %v1066
          %v1068 = vpop.xlane.xlu0 %1067
          %v1069 = vsel %vm918, %v1031, 0.0
          %1070 = vadd.xlane.f32.xlu0 %v1069
          %v1071 = vpop.xlane.xlu0 %1070
          %v1072 = vsel %vm918, %v1032, 0.0
          %1073 = vadd.xlane.f32.xlu0 %v1072
          %v1074 = vpop.xlane.xlu0 %1073
          %v1075 = vsel %vm918, %v1033, 0.0
          %1076 = vadd.xlane.f32.xlu0 %v1075
          %v1077 = vpop.xlane.xlu0 %1076
          %v1078 = vsel %vm918, %v1034, 0.0
          %1079 = vadd.xlane.f32.xlu0 %v1078
          %v1080 = vpop.xlane.xlu0 %1079
          %v1081 = vsel %vm918, %v1035, 0.0
          %1082 = vadd.xlane.f32.xlu0 %v1081
          %v1083 = vpop.xlane.xlu0 %1082
          %v1100 = vlaneseq
          %v1101 = vand.u32 %v1100, 127
          %v1102 = vperm.slane %v1038, %v1101
          %v1103 = vperm.slane %v1041, %v1101
          %v1104 = vperm.slane %v1044, %v1101
          %v1105 = vperm.slane %v1047, %v1101
          %v1106 = vperm.slane %v1050, %v1101
          %v1107 = vperm.slane %v1053, %v1101
          %v1108 = vperm.slane %v1056, %v1101
          %v1109 = vperm.slane %v1059, %v1101
          %v1110 = vperm.slane %v1062, %v1101
          %v1111 = vperm.slane %v1065, %v1101
          %v1112 = vperm.slane %v1068, %v1101
          %v1113 = vperm.slane %v1071, %v1101
          %v1114 = vperm.slane %v1074, %v1101
          %v1115 = vperm.slane %v1077, %v1101
          %v1116 = vperm.slane %v1080, %v1101
          %v1117 = vperm.slane %v1083, %v1101
          %vm1118 = vcmask 1041409
          %v1119 = vsel %vm1118, %v1103, %v1102
          %vm1120 = vcmask 1042434
          %v1121 = vsel %vm1120, %v1104, %v1119
          %vm1122 = vcmask 1043459
          %v1123 = vsel %vm1122, %v1105, %v1121
          %vm1124 = vcmask 1044484
          %v1125 = vsel %vm1124, %v1106, %v1123
          %vm1126 = vcmask 1045509
          %v1127 = vsel %vm1126, %v1107, %v1125
          %vm1128 = vcmask 1046534
          %v1129 = vsel %vm1128, %v1108, %v1127
          %vm1130 = vcmask 1047559
          %v1131 = vsel %vm1130, %v1109, %v1129
          %v1132 = vsel %vm1118, %v1111, %v1110
          %v1133 = vsel %vm1120, %v1112, %v1132
          %v1134 = vsel %vm1122, %v1113, %v1133
          %v1135 = vsel %vm1124, %v1114, %v1134
          %v1136 = vsel %vm1126, %v1115, %v1135
          %v1137 = vsel %vm1128, %v1116, %v1136
          %v1138 = vsel %vm1130, %v1117, %v1137
          %vm1141 = vcmask 64512
          %v1142 = vsel %vm1141, %v1131, -inf
          %1143 = vmax.xlane.f32.xlu0 %v1142
          %v1144 = vpop.xlane.xlu0 %1143
          %v1145 = vsel %vm1141, %v1138, -inf
          %1146 = vmax.xlane.f32.xlu0 %v1145
          %v1147 = vpop.xlane.xlu0 %1146
          %v1150 = vperm.slane %v1144, 0
          %v1151 = vperm.slane %v1144, 1
          %v1152 = vperm.slane %v1144, 2
          %v1153 = vperm.slane %v1144, 3
          %v1154 = vperm.slane %v1144, 4
          %v1155 = vperm.slane %v1144, 5
          %v1156 = vperm.slane %v1144, 6
          %v1157 = vperm.slane %v1144, 7
          %v1158 = vperm.slane %v1147, 0
          %v1159 = vperm.slane %v1147, 1
          %v1160 = vperm.slane %v1147, 2
          %v1161 = vperm.slane %v1147, 3
          %v1162 = vperm.slane %v1147, 4
          %v1163 = vperm.slane %v1147, 5
          %v1164 = vperm.slane %v1147, 6
          %v1165 = vperm.slane %v1147, 7
          %v1182 = vsub.f32 %v1038, %v1150
          %v1183 = vsub.f32 %v1041, %v1151
          %v1184 = vsub.f32 %v1044, %v1152
          %v1185 = vsub.f32 %v1047, %v1153
          %v1186 = vsub.f32 %v1050, %v1154
          %v1187 = vsub.f32 %v1053, %v1155
          %v1188 = vsub.f32 %v1056, %v1156
          %v1189 = vsub.f32 %v1059, %v1157
          %v1190 = vsub.f32 %v1062, %v1158
          %v1191 = vsub.f32 %v1065, %v1159
          %v1192 = vsub.f32 %v1068, %v1160
          %v1193 = vsub.f32 %v1071, %v1161
          %v1194 = vsub.f32 %v1074, %v1162
          %v1195 = vsub.f32 %v1077, %v1163
          %v1196 = vsub.f32 %v1080, %v1164
          %v1197 = vsub.f32 %v1083, %v1165
          %v1198 = vmul.f32 %v1182, 1.442695
          %v1199 = vpow.pop %v1198
          %v1200 = vmul.f32 %v1183, 1.442695
          %v1201 = vpow.pop %v1200
          %v1202 = vmul.f32 %v1184, 1.442695
          %v1203 = vpow.pop %v1202
          %v1204 = vmul.f32 %v1185, 1.442695
          %v1205 = vpow.pop %v1204
          %v1206 = vmul.f32 %v1186, 1.442695
          %v1207 = vpow.pop %v1206
          %v1208 = vmul.f32 %v1187, 1.442695
          %v1209 = vpow.pop %v1208
          %v1210 = vmul.f32 %v1188, 1.442695
          %v1211 = vpow.pop %v1210
          %v1212 = vmul.f32 %v1189, 1.442695
          %v1213 = vpow.pop %v1212
          %v1214 = vmul.f32 %v1190, 1.442695
          %v1215 = vpow.pop %v1214
          %v1216 = vmul.f32 %v1191, 1.442695
          %v1217 = vpow.pop %v1216
          %v1218 = vmul.f32 %v1192, 1.442695
          %v1219 = vpow.pop %v1218
          %v1220 = vmul.f32 %v1193, 1.442695
          %v1221 = vpow.pop %v1220
          %v1222 = vmul.f32 %v1194, 1.442695
          %v1223 = vpow.pop %v1222
          %v1224 = vmul.f32 %v1195, 1.442695
          %v1225 = vpow.pop %v1224
          %v1226 = vmul.f32 %v1196, 1.442695
          %v1227 = vpow.pop %v1226
          %v1228 = vmul.f32 %v1197, 1.442695
          %v1229 = vpow.pop %v1228
          %1246 = vset.pattern.permute.xlu0 0
          %1247 = vperm.xlu0 %1246, %v1199
          %v1248 = vpop.permute.xlu0 %1247
          %1249 = vset.pattern.permute.xlu0 0
          %1250 = vperm.xlu0 %1249, %v1201
          %v1251 = vpop.permute.xlu0 %1250
          %1252 = vset.pattern.permute.xlu0 0
          %1253 = vperm.xlu0 %1252, %v1203
          %v1254 = vpop.permute.xlu0 %1253
          %1255 = vset.pattern.permute.xlu0 0
          %1256 = vperm.xlu0 %1255, %v1205
          %v1257 = vpop.permute.xlu0 %1256
          %1258 = vset.pattern.permute.xlu0 0
          %1259 = vperm.xlu0 %1258, %v1207
          %v1260 = vpop.permute.xlu0 %1259
          %1261 = vset.pattern.permute.xlu0 0
          %1262 = vperm.xlu0 %1261, %v1209
          %v1263 = vpop.permute.xlu0 %1262
          %1264 = vset.pattern.permute.xlu0 0
          %1265 = vperm.xlu0 %1264, %v1211
          %v1266 = vpop.permute.xlu0 %1265
          %1267 = vset.pattern.permute.xlu0 0
          %1268 = vperm.xlu0 %1267, %v1213
          %v1269 = vpop.permute.xlu0 %1268
          %1270 = vset.pattern.permute.xlu0 0
          %1271 = vperm.xlu0 %1270, %v1215
          %v1272 = vpop.permute.xlu0 %1271
          %1273 = vset.pattern.permute.xlu0 0
          %1274 = vperm.xlu0 %1273, %v1217
          %v1275 = vpop.permute.xlu0 %1274
          %1276 = vset.pattern.permute.xlu0 0
          %1277 = vperm.xlu0 %1276, %v1219
          %v1278 = vpop.permute.xlu0 %1277
          %1279 = vset.pattern.permute.xlu0 0
          %1280 = vperm.xlu0 %1279, %v1221
          %v1281 = vpop.permute.xlu0 %1280
          %1282 = vset.pattern.permute.xlu0 0
          %1283 = vperm.xlu0 %1282, %v1223
          %v1284 = vpop.permute.xlu0 %1283
          %1285 = vset.pattern.permute.xlu0 0
          %1286 = vperm.xlu0 %1285, %v1225
          %v1287 = vpop.permute.xlu0 %1286
          %1288 = vset.pattern.permute.xlu0 0
          %1289 = vperm.xlu0 %1288, %v1227
          %v1290 = vpop.permute.xlu0 %1289
          %1291 = vset.pattern.permute.xlu0 0
          %1292 = vperm.xlu0 %1291, %v1229
          %v1293 = vpop.permute.xlu0 %1292
          %v1294 = vperm.slane %v1248, %v1101
          %v1295 = vperm.slane %v1251, %v1101
          %v1296 = vperm.slane %v1254, %v1101
          %v1297 = vperm.slane %v1257, %v1101
          %v1298 = vperm.slane %v1260, %v1101
          %v1299 = vperm.slane %v1263, %v1101
          %v1300 = vperm.slane %v1266, %v1101
          %v1301 = vperm.slane %v1269, %v1101
          %v1302 = vperm.slane %v1272, %v1101
          %v1303 = vperm.slane %v1275, %v1101
          %v1304 = vperm.slane %v1278, %v1101
          %v1305 = vperm.slane %v1281, %v1101
          %v1306 = vperm.slane %v1284, %v1101
          %v1307 = vperm.slane %v1287, %v1101
          %v1308 = vperm.slane %v1290, %v1101
          %v1309 = vperm.slane %v1293, %v1101
          %v1310 = vsel %vm1118, %v1295, %v1294
          %v1311 = vsel %vm1120, %v1296, %v1310
          %v1312 = vsel %vm1122, %v1297, %v1311
          %v1313 = vsel %vm1124, %v1298, %v1312
          %v1314 = vsel %vm1126, %v1299, %v1313
          %v1315 = vsel %vm1128, %v1300, %v1314
          %v1316 = vsel %vm1130, %v1301, %v1315
          %v1317 = vsel %vm1118, %v1303, %v1302
          %v1318 = vsel %vm1120, %v1304, %v1317
          %v1319 = vsel %vm1122, %v1305, %v1318
          %v1320 = vsel %vm1124, %v1306, %v1319
          %v1321 = vsel %vm1126, %v1307, %v1320
          %v1322 = vsel %vm1128, %v1308, %v1321
          %v1323 = vsel %vm1130, %v1309, %v1322
          %v1326 = vsel %vm1141, %v1316, 0.0
          %1327 = vadd.xlane.f32.xlu0 %v1326
          %v1328 = vpop.xlane.xlu0 %1327
          %v1329 = vsel %vm1141, %v1323, 0.0
          %1330 = vadd.xlane.f32.xlu0 %v1329
          %v1331 = vpop.xlane.xlu0 %1330
          %v1332 = vrcp.pop %v1328
          %v1333 = vrcp.pop %v1331
          %v1336 = vperm.slane %v1332, 0
          %v1337 = vperm.slane %v1332, 1
          %v1338 = vperm.slane %v1332, 2
          %v1339 = vperm.slane %v1332, 3
          %v1340 = vperm.slane %v1332, 4
          %v1341 = vperm.slane %v1332, 5
          %v1342 = vperm.slane %v1332, 6
          %v1343 = vperm.slane %v1332, 7
          %v1344 = vperm.slane %v1333, 0
          %v1345 = vperm.slane %v1333, 1
          %v1346 = vperm.slane %v1333, 2
          %v1347 = vperm.slane %v1333, 3
          %v1348 = vperm.slane %v1333, 4
          %v1349 = vperm.slane %v1333, 5
          %v1350 = vperm.slane %v1333, 6
          %v1351 = vperm.slane %v1333, 7
          %v1368 = vmul.f32 %v1199, %v1336
          %v1369 = vmul.f32 %v1201, %v1337
          %v1370 = vmul.f32 %v1203, %v1338
          %v1371 = vmul.f32 %v1205, %v1339
          %v1372 = vmul.f32 %v1207, %v1340
          %v1373 = vmul.f32 %v1209, %v1341
          %v1374 = vmul.f32 %v1211, %v1342
          %v1375 = vmul.f32 %v1213, %v1343
          %v1376 = vmul.f32 %v1215, %v1344
          %v1377 = vmul.f32 %v1217, %v1345
          %v1378 = vmul.f32 %v1219, %v1346
          %v1379 = vmul.f32 %v1221, %v1347
          %v1380 = vmul.f32 %v1223, %v1348
          %v1381 = vmul.f32 %v1225, %v1349
          %v1382 = vmul.f32 %v1227, %v1350
          %v1383 = vmul.f32 %v1229, %v1351
          %1385 = vset.pattern.permute.xlu0 0
          %1386 = vperm.xlu0 %1385, %v1368
          %v1387 = vpop.permute.xlu0 %1386
          %1390 = vset.pattern.permute.xlu0 0
          %1391 = vperm.xlu0 %1390, %v1369
          %v1392 = vpop.permute.xlu0 %1391
          %1395 = vset.pattern.permute.xlu0 0
          %1396 = vperm.xlu0 %1395, %v1370
          %v1397 = vpop.permute.xlu0 %1396
          %1400 = vset.pattern.permute.xlu0 0
          %1401 = vperm.xlu0 %1400, %v1371
          %v1402 = vpop.permute.xlu0 %1401
          %1405 = vset.pattern.permute.xlu0 0
          %1406 = vperm.xlu0 %1405, %v1372
          %v1407 = vpop.permute.xlu0 %1406
          %1410 = vset.pattern.permute.xlu0 0
          %1411 = vperm.xlu0 %1410, %v1373
          %v1412 = vpop.permute.xlu0 %1411
          %1415 = vset.pattern.permute.xlu0 0
          %1416 = vperm.xlu0 %1415, %v1374
          %v1417 = vpop.permute.xlu0 %1416
          %1420 = vset.pattern.permute.xlu0 0
          %1421 = vperm.xlu0 %1420, %v1375
          %v1422 = vpop.permute.xlu0 %1421
          %1425 = vset.pattern.permute.xlu0 0
          %1426 = vperm.xlu0 %1425, %v1376
          %v1427 = vpop.permute.xlu0 %1426
          %1430 = vset.pattern.permute.xlu0 0
          %1431 = vperm.xlu0 %1430, %v1377
          %v1432 = vpop.permute.xlu0 %1431
          %1435 = vset.pattern.permute.xlu0 0
          %1436 = vperm.xlu0 %1435, %v1378
          %v1437 = vpop.permute.xlu0 %1436
          %1440 = vset.pattern.permute.xlu0 0
          %1441 = vperm.xlu0 %1440, %v1379
          %v1442 = vpop.permute.xlu0 %1441
          %1445 = vset.pattern.permute.xlu0 0
          %1446 = vperm.xlu0 %1445, %v1380
          %v1447 = vpop.permute.xlu0 %1446
          %1450 = vset.pattern.permute.xlu0 0
          %1451 = vperm.xlu0 %1450, %v1381
          %v1452 = vpop.permute.xlu0 %1451
          %1455 = vset.pattern.permute.xlu0 0
          %1456 = vperm.xlu0 %1455, %v1382
          %v1457 = vpop.permute.xlu0 %1456
          %1460 = vset.pattern.permute.xlu0 0
          %1461 = vperm.xlu0 %1460, %v1383
          %v1462 = vpop.permute.xlu0 %1461
          %v1464 = vmul.f32 %v1387, %v865
          %v1465 = vmul.f32 %v1392, %v866
          %v1466 = vmul.f32 %v1397, %v867
          %v1467 = vmul.f32 %v1402, %v868
          %v1468 = vmul.f32 %v1407, %v869
          %v1469 = vmul.f32 %v1412, %v870
          %v1470 = vmul.f32 %v1417, %v871
          %v1471 = vmul.f32 %v1422, %v872
          %v1472 = vmul.f32 %v1427, %v873
          %v1473 = vmul.f32 %v1432, %v874
          %v1474 = vmul.f32 %v1437, %v875
          %v1475 = vmul.f32 %v1442, %v876
          %v1476 = vmul.f32 %v1447, %v877
          %v1477 = vmul.f32 %v1452, %v878
          %v1478 = vmul.f32 %v1457, %v879
          %v1479 = vmul.f32 %v1462, %v880
          %vm1480 = vcmask 523264
          %v1481 = vsel %vm1480, %v1464, 0.0
          %v1482 = vrot.slane %v1481, 4
          %v1483 = vadd.f32 %v1481, %v1482
          %v1484 = vrot.slane %v1483, 2
          %v1485 = vadd.f32 %v1483, %v1484
          %v1486 = vrot.slane %v1485, 1
          %v1487 = vadd.f32 %v1485, %v1486
          %v1488 = vsel %vm1480, %v1465, 0.0
          %v1489 = vrot.slane %v1488, 4
          %v1490 = vadd.f32 %v1488, %v1489
          %v1491 = vrot.slane %v1490, 2
          %v1492 = vadd.f32 %v1490, %v1491
          %v1493 = vrot.slane %v1492, 1
          %v1494 = vadd.f32 %v1492, %v1493
          %v1495 = vsel %vm1480, %v1466, 0.0
          %v1496 = vrot.slane %v1495, 4
          %v1497 = vadd.f32 %v1495, %v1496
          %v1498 = vrot.slane %v1497, 2
          %v1499 = vadd.f32 %v1497, %v1498
          %v1500 = vrot.slane %v1499, 1
          %v1501 = vadd.f32 %v1499, %v1500
          %v1502 = vsel %vm1480, %v1467, 0.0
          %v1503 = vrot.slane %v1502, 4
          %v1504 = vadd.f32 %v1502, %v1503
          %v1505 = vrot.slane %v1504, 2
          %v1506 = vadd.f32 %v1504, %v1505
          %v1507 = vrot.slane %v1506, 1
          %v1508 = vadd.f32 %v1506, %v1507
          %v1509 = vsel %vm1480, %v1468, 0.0
          %v1510 = vrot.slane %v1509, 4
          %v1511 = vadd.f32 %v1509, %v1510
          %v1512 = vrot.slane %v1511, 2
          %v1513 = vadd.f32 %v1511, %v1512
          %v1514 = vrot.slane %v1513, 1
          %v1515 = vadd.f32 %v1513, %v1514
          %v1516 = vsel %vm1480, %v1469, 0.0
          %v1517 = vrot.slane %v1516, 4
          %v1518 = vadd.f32 %v1516, %v1517
          %v1519 = vrot.slane %v1518, 2
          %v1520 = vadd.f32 %v1518, %v1519
          %v1521 = vrot.slane %v1520, 1
          %v1522 = vadd.f32 %v1520, %v1521
          %v1523 = vsel %vm1480, %v1470, 0.0
          %v1524 = vrot.slane %v1523, 4
          %v1525 = vadd.f32 %v1523, %v1524
          %v1526 = vrot.slane %v1525, 2
          %v1527 = vadd.f32 %v1525, %v1526
          %v1528 = vrot.slane %v1527, 1
          %v1529 = vadd.f32 %v1527, %v1528
          %v1530 = vsel %vm1480, %v1471, 0.0
          %v1531 = vrot.slane %v1530, 4
          %v1532 = vadd.f32 %v1530, %v1531
          %v1533 = vrot.slane %v1532, 2
          %v1534 = vadd.f32 %v1532, %v1533
          %v1535 = vrot.slane %v1534, 1
          %v1536 = vadd.f32 %v1534, %v1535
          %v1537 = vsel %vm1480, %v1472, 0.0
          %v1538 = vrot.slane %v1537, 4
          %v1539 = vadd.f32 %v1537, %v1538
          %v1540 = vrot.slane %v1539, 2
          %v1541 = vadd.f32 %v1539, %v1540
          %v1542 = vrot.slane %v1541, 1
          %v1543 = vadd.f32 %v1541, %v1542
          %v1544 = vsel %vm1480, %v1473, 0.0
          %v1545 = vrot.slane %v1544, 4
          %v1546 = vadd.f32 %v1544, %v1545
          %v1547 = vrot.slane %v1546, 2
          %v1548 = vadd.f32 %v1546, %v1547
          %v1549 = vrot.slane %v1548, 1
          %v1550 = vadd.f32 %v1548, %v1549
          %v1551 = vsel %vm1480, %v1474, 0.0
          %v1552 = vrot.slane %v1551, 4
          %v1553 = vadd.f32 %v1551, %v1552
          %v1554 = vrot.slane %v1553, 2
          %v1555 = vadd.f32 %v1553, %v1554
          %v1556 = vrot.slane %v1555, 1
          %v1557 = vadd.f32 %v1555, %v1556
          %v1558 = vsel %vm1480, %v1475, 0.0
          %v1559 = vrot.slane %v1558, 4
          %v1560 = vadd.f32 %v1558, %v1559
          %v1561 = vrot.slane %v1560, 2
          %v1562 = vadd.f32 %v1560, %v1561
          %v1563 = vrot.slane %v1562, 1
          %v1564 = vadd.f32 %v1562, %v1563
          %v1565 = vsel %vm1480, %v1476, 0.0
          %v1566 = vrot.slane %v1565, 4
          %v1567 = vadd.f32 %v1565, %v1566
          %v1568 = vrot.slane %v1567, 2
          %v1569 = vadd.f32 %v1567, %v1568
          %v1570 = vrot.slane %v1569, 1
          %v1571 = vadd.f32 %v1569, %v1570
          %v1572 = vsel %vm1480, %v1477, 0.0
          %v1573 = vrot.slane %v1572, 4
          %v1574 = vadd.f32 %v1572, %v1573
          %v1575 = vrot.slane %v1574, 2
          %v1576 = vadd.f32 %v1574, %v1575
          %v1577 = vrot.slane %v1576, 1
          %v1578 = vadd.f32 %v1576, %v1577
          %v1579 = vsel %vm1480, %v1478, 0.0
          %v1580 = vrot.slane %v1579, 4
          %v1581 = vadd.f32 %v1579, %v1580
          %v1582 = vrot.slane %v1581, 2
          %v1583 = vadd.f32 %v1581, %v1582
          %v1584 = vrot.slane %v1583, 1
          %v1585 = vadd.f32 %v1583, %v1584
          %v1586 = vsel %vm1480, %v1479, 0.0
          %v1587 = vrot.slane %v1586, 4
          %v1588 = vadd.f32 %v1586, %v1587
          %v1589 = vrot.slane %v1588, 2
          %v1590 = vadd.f32 %v1588, %v1589
          %v1591 = vrot.slane %v1590, 1
          %v1592 = vadd.f32 %v1590, %v1591
          %v1609 = vsel %vm1118, %v1494, %v1487
          %v1610 = vsel %vm1120, %v1501, %v1609
          %v1611 = vsel %vm1122, %v1508, %v1610
          %v1612 = vsel %vm1124, %v1515, %v1611
          %v1613 = vsel %vm1126, %v1522, %v1612
          %v1614 = vsel %vm1128, %v1529, %v1613
          %v1615 = vsel %vm1130, %v1536, %v1614
          %v1616 = vsel %vm1118, %v1550, %v1543
          %v1617 = vsel %vm1120, %v1557, %v1616
          %v1618 = vsel %vm1122, %v1564, %v1617
          %v1619 = vsel %vm1124, %v1571, %v1618
          %v1620 = vsel %vm1126, %v1578, %v1619
          %v1621 = vsel %vm1128, %v1585, %v1620
          %v1622 = vsel %vm1130, %v1592, %v1621
          %1625 = vst.msk [vmem:[#allocation2] sm:$0xff] %vm1480, %v1615
          %1626 = vst.msk [vmem:[#allocation2 + $0x8] sm:$0xff] %vm1480, %v1622
          %v1627 = vpack.c.bf16 %v862, %v861
          %v1628 = vpack.c.bf16 %v1487, %v1487
          %v1629 = vpack.c.bf16 %v1494, %v1494
          %v1630 = vpack.c.bf16 %v1501, %v1501
          %v1631 = vpack.c.bf16 %v1508, %v1508
          %v1632 = vpack.c.bf16 %v1515, %v1515
          %v1633 = vpack.c.bf16 %v1522, %v1522
          %v1634 = vpack.c.bf16 %v1529, %v1529
          %v1635 = vpack.c.bf16 %v1536, %v1536
          %v1636 = vpack.c.bf16 %v1543, %v1543
          %v1637 = vpack.c.bf16 %v1550, %v1550
          %v1638 = vpack.c.bf16 %v1557, %v1557
          %v1639 = vpack.c.bf16 %v1564, %v1564
          %v1640 = vpack.c.bf16 %v1571, %v1571
          %v1641 = vpack.c.bf16 %v1578, %v1578
          %v1642 = vpack.c.bf16 %v1585, %v1585
          %v1643 = vpack.c.bf16 %v1592, %v1592
          %v1644 = vld [vmem:[%s7] sm:$0xf]
          %v1645 = vld [vmem:[%s7 + $0x4] sm:$0xf]
          %v1646 = vld [vmem:[%s7 + $0x8] sm:$0xf]
          %v1647 = vld [vmem:[%s7 + $0xc] sm:$0xf]
          %v1648 = vld [vmem:[%s8] sm:$0xf]
          %v1649 = vld [vmem:[%s8 + $0x4] sm:$0xf]
          %v1650 = vld [vmem:[%s8 + $0x8] sm:$0xf]
          %v1651 = vld [vmem:[%s8 + $0xc] sm:$0xf]
          %v1652 = vld [vmem:[%s8 + $0x10] sm:$0xf]
          %v1653 = vld [vmem:[%s8 + $0x14] sm:$0xf]
          %v1654 = vld [vmem:[%s8 + $0x18] sm:$0xf]
          %v1655 = vld [vmem:[%s8 + $0x1c] sm:$0xf]
          %v1672 = vunpack.c.l.b16 %v1628
          %v1673 = vunpack.c.l.b16 %v1629
          %v1674 = vunpack.c.l.b16 %v1630
          %v1675 = vunpack.c.l.b16 %v1631
          %v1676 = vunpack.c.l.b16 %v1632
          %v1677 = vunpack.c.l.b16 %v1633
          %v1678 = vunpack.c.l.b16 %v1634
          %v1679 = vunpack.c.l.b16 %v1635
          %v1680 = vunpack.c.l.b16 %v1636
          %v1681 = vunpack.c.l.b16 %v1637
          %v1682 = vunpack.c.l.b16 %v1638
          %v1683 = vunpack.c.l.b16 %v1639
          %v1684 = vunpack.c.l.b16 %v1640
          %v1685 = vunpack.c.l.b16 %v1641
          %v1686 = vunpack.c.l.b16 %v1642
          %v1687 = vunpack.c.l.b16 %v1643
          %v1688 = vsel %vm1118, %v1673, %v1672
          %v1689 = vsel %vm1120, %v1674, %v1688
          %v1690 = vsel %vm1122, %v1675, %v1689
          %v1691 = vsel %vm1124, %v1676, %v1690
          %v1692 = vsel %vm1126, %v1677, %v1691
          %v1693 = vsel %vm1128, %v1678, %v1692
          %v1694 = vsel %vm1130, %v1679, %v1693
          %v1695 = vsel %vm1118, %v1681, %v1680
          %v1696 = vsel %vm1120, %v1682, %v1695
          %v1697 = vsel %vm1122, %v1683, %v1696
          %v1698 = vsel %vm1124, %v1684, %v1697
          %v1699 = vsel %vm1126, %v1685, %v1698
          %v1700 = vsel %vm1128, %v1686, %v1699
          %v1701 = vsel %vm1130, %v1687, %v1700
          %v1702 = vpack.c.b16 %v1701, %v1694
          %v1711 = vunpack.c.l.b16 %v1648
          %v1712 = vunpack.c.l.b16 %v1649
          %v1713 = vunpack.c.l.b16 %v1650
          %v1714 = vunpack.c.l.b16 %v1651
          %v1715 = vunpack.c.l.b16 %v1652
          %v1716 = vunpack.c.l.b16 %v1653
          %v1717 = vunpack.c.l.b16 %v1654
          %v1718 = vunpack.c.l.b16 %v1655
          %v1719 = vpack.c.b16 %v1712, %v1711
          %v1720 = vpack.c.b16 %v1714, %v1713
          %v1721 = vpack.c.b16 %v1716, %v1715
          %v1722 = vpack.c.b16 %v1718, %v1717
          %v1728 = vsel %vm1480, %v1702, 0
          %1730 = vmatpush.bf16.msra.mxu0 0
          %1731 = vmatpush.bf16.msra.mxu0 0
          %1732 = vmatpush.bf16.msra.mxu0 0
          %1733 = vmatpush.bf16.msra.mxu0 0
          %1734 = vmatpush.bf16.msra.mxu0 %v1722
          %1735 = vmatpush.bf16.msra.mxu0 %v1721
          %1736 = vmatpush.bf16.msra.mxu0 %v1720
          %1737 = vmatpush.bf16.msra.mxu0 %v1719
          %1738 = vmatmul.bf16.gmra.mxu0 %v1728
          %v1739 = vpop.f32.mrf.mxu0
          %v1740 = vadd.f32 0.0, %v1739
          %v1741 = vpop.f32.mrf.mxu0
          %v1742 = vadd.f32 0.0, %v1741
          %1743 = vdwg.mxu0
          %v1748 = vunpack.c.l.b16 %v1644
          %v1749 = vunpack.c.l.b16 %v1645
          %v1750 = vunpack.c.l.b16 %v1646
          %v1751 = vunpack.c.l.b16 %v1647
          %v1752 = vpack.c.b16 %v1749, %v1748
          %v1753 = vpack.c.b16 %v1751, %v1750
          %v1757 = vsel %vm918, %v1627, 0
          %1759 = vmatpush.bf16.msra.mxu0 0
          %1760 = vmatpush.bf16.msra.mxu0 0
          %1761 = vmatpush.bf16.msra.mxu0 0
          %1762 = vmatpush.bf16.msra.mxu0 0
          %1763 = vmatpush.bf16.msra.mxu0 0
          %1764 = vmatpush.bf16.msra.mxu0 0
          %1765 = vmatpush.bf16.msra.mxu0 %v1753
          %1766 = vmatpush.bf16.msra.mxu0 %v1752
          %1767 = vmatmul.bf16.gmra.mxu0 %v1757
          %v1768 = vpop.f32.mrf.mxu0
          %v1769 = vadd.f32 %v1740, %v1768
          %v1770 = vpop.f32.mrf.mxu0
          %v1771 = vadd.f32 %v1742, %v1770
          %1772 = vdwg.mxu0
          %v1773 = vld [vmem:[%s9] sm:$0x1]
          %v1775 = vperm.slane %v1773, 0
          %v1777 = vadd.f32 %v1769, %v1775
          %v1778 = vadd.f32 %v1771, %v1775
          %v1779 = vld [vmem:[#allocation13] sm:$0xf]
          %v1780 = vld [vmem:[#allocation13 + $0x4] sm:$0xf]
          %v1781 = vld [vmem:[#allocation13 + $0x8] sm:$0xf]
          %v1782 = vld [vmem:[#allocation13 + $0xc] sm:$0xf]
          %v1783 = vld [vmem:[#allocation15] sm:$0x1]
          %v1785 = vperm.slane %v1783, 0
          %v1791 = vunpack.c.l.b16 %v1779
          %v1792 = vunpack.c.l.b16 %v1780
          %v1793 = vunpack.c.l.b16 %v1781
          %v1794 = vunpack.c.l.b16 %v1782
          %v1795 = vpack.c.b16 %v1792, %v1791
          %v1796 = vpack.c.b16 %v1794, %v1793
          %1799 = vmatpush.bf16.msra.mxu0 0
          %1800 = vmatpush.bf16.msra.mxu0 0
          %1801 = vmatpush.bf16.msra.mxu0 0
          %1802 = vmatpush.bf16.msra.mxu0 0
          %1803 = vmatpush.bf16.msra.mxu0 0
          %1804 = vmatpush.bf16.msra.mxu0 0
          %1805 = vmatpush.bf16.msra.mxu0 %v1796
          %1806 = vmatpush.bf16.msra.mxu0 %v1795
          %1807 = vmatmul.bf16.gmra.mxu0 %v920
          %v1808 = vpop.f32.mrf.mxu0
          %v1809 = vadd.f32 %v1785, %v1808
          %v1810 = vpop.f32.mrf.mxu0
          %v1811 = vadd.f32 %v1785, %v1810
          %1812 = vdwg.mxu0
          %s1813 = scalar_lea.vmem %s7, 16
          %v1814 = vld [vmem:[%s1813] sm:$0xf]
          %v1815 = vld [vmem:[%s1813 + $0x4] sm:$0xf]
          %v1816 = vld [vmem:[%s1813 + $0x8] sm:$0xf]
          %v1817 = vld [vmem:[%s1813 + $0xc] sm:$0xf]
          %s1818 = scalar_lea.vmem %s8, 32
          %v1819 = vld [vmem:[%s1818] sm:$0xf]
          %v1820 = vld [vmem:[%s1818 + $0x4] sm:$0xf]
          %v1821 = vld [vmem:[%s1818 + $0x8] sm:$0xf]
          %v1822 = vld [vmem:[%s1818 + $0xc] sm:$0xf]
          %v1823 = vld [vmem:[%s1818 + $0x10] sm:$0xf]
          %v1824 = vld [vmem:[%s1818 + $0x14] sm:$0xf]
          %v1825 = vld [vmem:[%s1818 + $0x18] sm:$0xf]
          %v1826 = vld [vmem:[%s1818 + $0x1c] sm:$0xf]
          %v1835 = vunpack.c.l.b16 %v1819
          %v1836 = vunpack.c.l.b16 %v1820
          %v1837 = vunpack.c.l.b16 %v1821
          %v1838 = vunpack.c.l.b16 %v1822
          %v1839 = vunpack.c.l.b16 %v1823
          %v1840 = vunpack.c.l.b16 %v1824
          %v1841 = vunpack.c.l.b16 %v1825
          %v1842 = vunpack.c.l.b16 %v1826
          %v1843 = vpack.c.b16 %v1836, %v1835
          %v1844 = vpack.c.b16 %v1838, %v1837
          %v1845 = vpack.c.b16 %v1840, %v1839
          %v1846 = vpack.c.b16 %v1842, %v1841
          %1851 = vmatpush.bf16.msra.mxu0 0
          %1852 = vmatpush.bf16.msra.mxu0 0
          %1853 = vmatpush.bf16.msra.mxu0 0
          %1854 = vmatpush.bf16.msra.mxu0 0
          %1855 = vmatpush.bf16.msra.mxu0 %v1846
          %1856 = vmatpush.bf16.msra.mxu0 %v1845
          %1857 = vmatpush.bf16.msra.mxu0 %v1844
          %1858 = vmatpush.bf16.msra.mxu0 %v1843
          %1859 = vmatmul.bf16.gmra.mxu0 %v1728
          %v1860 = vpop.f32.mrf.mxu0
          %v1861 = vadd.f32 0.0, %v1860
          %v1862 = vpop.f32.mrf.mxu0
          %v1863 = vadd.f32 0.0, %v1862
          %1864 = vdwg.mxu0
          %v1869 = vunpack.c.l.b16 %v1814
          %v1870 = vunpack.c.l.b16 %v1815
          %v1871 = vunpack.c.l.b16 %v1816
          %v1872 = vunpack.c.l.b16 %v1817
          %v1873 = vpack.c.b16 %v1870, %v1869
          %v1874 = vpack.c.b16 %v1872, %v1871
          %1877 = vmatpush.bf16.msra.mxu0 0
          %1878 = vmatpush.bf16.msra.mxu0 0
          %1879 = vmatpush.bf16.msra.mxu0 0
          %1880 = vmatpush.bf16.msra.mxu0 0
          %1881 = vmatpush.bf16.msra.mxu0 0
          %1882 = vmatpush.bf16.msra.mxu0 0
          %1883 = vmatpush.bf16.msra.mxu0 %v1874
          %1884 = vmatpush.bf16.msra.mxu0 %v1873
          %1885 = vmatmul.bf16.gmra.mxu0 %v1757
          %v1886 = vpop.f32.mrf.mxu0
          %v1887 = vadd.f32 %v1861, %v1886
          %v1888 = vpop.f32.mrf.mxu0
          %v1889 = vadd.f32 %v1863, %v1888
          %1890 = vdwg.mxu0
          %s1891 = scalar_lea.vmem %s9, 1
          %v1892 = vld [vmem:[%s1891] sm:$0x1]
          %v1894 = vperm.slane %v1892, 0
          %v1896 = vadd.f32 %v1887, %v1894
          %v1897 = vadd.f32 %v1889, %v1894
          %s1898 = scalar_lea.vmem [#allocation13], 16
          %v1899 = vld [vmem:[%s1898] sm:$0xf]
          %v1900 = vld [vmem:[%s1898 + $0x4] sm:$0xf]
          %v1901 = vld [vmem:[%s1898 + $0x8] sm:$0xf]
          %v1902 = vld [vmem:[%s1898 + $0xc] sm:$0xf]
          %s1903 = scalar_lea.vmem [#allocation15], 1
          %v1904 = vld [vmem:[%s1903] sm:$0x1]
          %v1906 = vperm.slane %v1904, 0
          %v1912 = vunpack.c.l.b16 %v1899
          %v1913 = vunpack.c.l.b16 %v1900
          %v1914 = vunpack.c.l.b16 %v1901
          %v1915 = vunpack.c.l.b16 %v1902
          %v1916 = vpack.c.b16 %v1913, %v1912
          %v1917 = vpack.c.b16 %v1915, %v1914
          %1920 = vmatpush.bf16.msra.mxu0 0
          %1921 = vmatpush.bf16.msra.mxu0 0
          %1922 = vmatpush.bf16.msra.mxu0 0
          %1923 = vmatpush.bf16.msra.mxu0 0
          %1924 = vmatpush.bf16.msra.mxu0 0
          %1925 = vmatpush.bf16.msra.mxu0 0
          %1926 = vmatpush.bf16.msra.mxu0 %v1917
          %1927 = vmatpush.bf16.msra.mxu0 %v1916
          %1928 = vmatmul.bf16.gmra.mxu0 %v920
          %v1929 = vpop.f32.mrf.mxu0
          %v1930 = vadd.f32 %v1906, %v1929
          %v1931 = vpop.f32.mrf.mxu0
          %v1932 = vadd.f32 %v1906, %v1931
          %1933 = vdwg.mxu0
          %s1934 = scalar_lea.vmem %s7, 32
          %v1935 = vld [vmem:[%s1934] sm:$0xf]
          %v1936 = vld [vmem:[%s1934 + $0x4] sm:$0xf]
          %v1937 = vld [vmem:[%s1934 + $0x8] sm:$0xf]
          %v1938 = vld [vmem:[%s1934 + $0xc] sm:$0xf]
          %s1939 = scalar_lea.vmem %s8, 64
          %v1940 = vld [vmem:[%s1939] sm:$0xf]
          %v1941 = vld [vmem:[%s1939 + $0x4] sm:$0xf]
          %v1942 = vld [vmem:[%s1939 + $0x8] sm:$0xf]
          %v1943 = vld [vmem:[%s1939 + $0xc] sm:$0xf]
          %v1944 = vld [vmem:[%s1939 + $0x10] sm:$0xf]
          %v1945 = vld [vmem:[%s1939 + $0x14] sm:$0xf]
          %v1946 = vld [vmem:[%s1939 + $0x18] sm:$0xf]
          %v1947 = vld [vmem:[%s1939 + $0x1c] sm:$0xf]
          %v1956 = vunpack.c.l.b16 %v1940
          %v1957 = vunpack.c.l.b16 %v1941
          %v1958 = vunpack.c.l.b16 %v1942
          %v1959 = vunpack.c.l.b16 %v1943
          %v1960 = vunpack.c.l.b16 %v1944
          %v1961 = vunpack.c.l.b16 %v1945
          %v1962 = vunpack.c.l.b16 %v1946
          %v1963 = vunpack.c.l.b16 %v1947
          %v1964 = vpack.c.b16 %v1957, %v1956
          %v1965 = vpack.c.b16 %v1959, %v1958
          %v1966 = vpack.c.b16 %v1961, %v1960
          %v1967 = vpack.c.b16 %v1963, %v1962
          %1972 = vmatpush.bf16.msra.mxu0 0
          %1973 = vmatpush.bf16.msra.mxu0 0
          %1974 = vmatpush.bf16.msra.mxu0 0
          %1975 = vmatpush.bf16.msra.mxu0 0
          %1976 = vmatpush.bf16.msra.mxu0 %v1967
          %1977 = vmatpush.bf16.msra.mxu0 %v1966
          %1978 = vmatpush.bf16.msra.mxu0 %v1965
          %1979 = vmatpush.bf16.msra.mxu0 %v1964
          %1980 = vmatmul.bf16.gmra.mxu0 %v1728
          %v1981 = vpop.f32.mrf.mxu0
          %v1982 = vadd.f32 0.0, %v1981
          %v1983 = vpop.f32.mrf.mxu0
          %v1984 = vadd.f32 0.0, %v1983
          %1985 = vdwg.mxu0
          %v1990 = vunpack.c.l.b16 %v1935
          %v1991 = vunpack.c.l.b16 %v1936
          %v1992 = vunpack.c.l.b16 %v1937
          %v1993 = vunpack.c.l.b16 %v1938
          %v1994 = vpack.c.b16 %v1991, %v1990
          %v1995 = vpack.c.b16 %v1993, %v1992
          %1998 = vmatpush.bf16.msra.mxu0 0
          %1999 = vmatpush.bf16.msra.mxu0 0
          %2000 = vmatpush.bf16.msra.mxu0 0
          %2001 = vmatpush.bf16.msra.mxu0 0
          %2002 = vmatpush.bf16.msra.mxu0 0
          %2003 = vmatpush.bf16.msra.mxu0 0
          %2004 = vmatpush.bf16.msra.mxu0 %v1995
          %2005 = vmatpush.bf16.msra.mxu0 %v1994
          %2006 = vmatmul.bf16.gmra.mxu0 %v1757
          %v2007 = vpop.f32.mrf.mxu0
          %v2008 = vadd.f32 %v1982, %v2007
          %v2009 = vpop.f32.mrf.mxu0
          %v2010 = vadd.f32 %v1984, %v2009
          %2011 = vdwg.mxu0
          %s2012 = scalar_lea.vmem %s9, 2
          %v2013 = vld [vmem:[%s2012] sm:$0x1]
          %v2015 = vperm.slane %v2013, 0
          %v2017 = vadd.f32 %v2008, %v2015
          %v2018 = vadd.f32 %v2010, %v2015
          %s2019 = scalar_lea.vmem [#allocation13], 32
          %v2020 = vld [vmem:[%s2019] sm:$0xf]
          %v2021 = vld [vmem:[%s2019 + $0x4] sm:$0xf]
          %v2022 = vld [vmem:[%s2019 + $0x8] sm:$0xf]
          %v2023 = vld [vmem:[%s2019 + $0xc] sm:$0xf]
          %s2024 = scalar_lea.vmem [#allocation15], 2
          %v2025 = vld [vmem:[%s2024] sm:$0x1]
          %v2027 = vperm.slane %v2025, 0
          %v2033 = vunpack.c.l.b16 %v2020
          %v2034 = vunpack.c.l.b16 %v2021
          %v2035 = vunpack.c.l.b16 %v2022
          %v2036 = vunpack.c.l.b16 %v2023
          %v2037 = vpack.c.b16 %v2034, %v2033
          %v2038 = vpack.c.b16 %v2036, %v2035
          %2041 = vmatpush.bf16.msra.mxu0 0
          %2042 = vmatpush.bf16.msra.mxu0 0
          %2043 = vmatpush.bf16.msra.mxu0 0
          %2044 = vmatpush.bf16.msra.mxu0 0
          %2045 = vmatpush.bf16.msra.mxu0 0
          %2046 = vmatpush.bf16.msra.mxu0 0
          %2047 = vmatpush.bf16.msra.mxu0 %v2038
          %2048 = vmatpush.bf16.msra.mxu0 %v2037
          %2049 = vmatmul.bf16.gmra.mxu0 %v920
          %v2050 = vpop.f32.mrf.mxu0
          %v2051 = vadd.f32 %v2027, %v2050
          %v2052 = vpop.f32.mrf.mxu0
          %v2053 = vadd.f32 %v2027, %v2052
          %2054 = vdwg.mxu0
          %v2055 = vadd.f32 %v1777, %v1809
          %v2056 = vadd.f32 %v1778, %v1811
          %v2057 = vxor.u32 %v2055, 2147483648
          %v2058 = vxor.u32 %v2056, 2147483648
          %v2059 = vmul.f32 %v2057, 1.442695
          %v2060 = vpow.pop %v2059
          %v2061 = vmul.f32 %v2058, 1.442695
          %v2062 = vpow.pop %v2061
          %v2063 = vadd.f32 %v2060, 1.0
          %v2064 = vadd.f32 %v2062, 1.0
          %v2065 = vrcp.pop %v2063
          %v2066 = vmul.f32 %v2063, %v2065
          %v2067 = vsub.f32 1.0, %v2066
          %v2068 = vmul.f32 %v2065, %v2067
          %v2069 = vadd.f32 %v2065, %v2068
          %vm2070 = vweird.f32 %v2063
          %vm2071 = vweird.f32 %v2065
          %vm2072 = vmor %vm2070, %vm2071
          %v2073 = vsel %vm2072, %v2065, %v2069
          %v2074 = vand.u32 2147483647, %v2063
          %vm2075 = vcmp.eq.f32.partialorder %v2074, 8.507059e+37
          %v2076 = vand.u32 %v2063, 2147483648
          %v2077 = vor.u32 1.1754944e-38, %v2076
          %v2078 = vsel %vm2075, %v2077, %v2073
          %v2079 = vmul.f32 1.0, %v2078
          %v2080 = vrcp.pop %v2064
          %v2081 = vmul.f32 %v2064, %v2080
          %v2082 = vsub.f32 1.0, %v2081
          %v2083 = vmul.f32 %v2080, %v2082
          %v2084 = vadd.f32 %v2080, %v2083
          %vm2085 = vweird.f32 %v2064
          %vm2086 = vweird.f32 %v2080
          %vm2087 = vmor %vm2085, %vm2086
          %v2088 = vsel %vm2087, %v2080, %v2084
          %v2089 = vand.u32 2147483647, %v2064
          %vm2090 = vcmp.eq.f32.partialorder %v2089, 8.507059e+37
          %v2091 = vand.u32 %v2064, 2147483648
          %v2092 = vor.u32 1.1754944e-38, %v2091
          %v2093 = vsel %vm2090, %v2092, %v2088
          %v2094 = vmul.f32 1.0, %v2093
          %v2095 = vadd.f32 %v1896, %v1930
          %v2096 = vadd.f32 %v1897, %v1932
          %v2097 = vxor.u32 %v2095, 2147483648
          %v2098 = vxor.u32 %v2096, 2147483648
          %v2099 = vmul.f32 %v2097, 1.442695
          %v2100 = vpow.pop %v2099
          %v2101 = vmul.f32 %v2098, 1.442695
          %v2102 = vpow.pop %v2101
          %v2103 = vadd.f32 %v2100, 1.0
          %v2104 = vadd.f32 %v2102, 1.0
          %v2105 = vrcp.pop %v2103
          %v2106 = vmul.f32 %v2103, %v2105
          %v2107 = vsub.f32 1.0, %v2106
          %v2108 = vmul.f32 %v2105, %v2107
          %v2109 = vadd.f32 %v2105, %v2108
          %vm2110 = vweird.f32 %v2103
          %vm2111 = vweird.f32 %v2105
          %vm2112 = vmor %vm2110, %vm2111
          %v2113 = vsel %vm2112, %v2105, %v2109
          %v2114 = vand.u32 2147483647, %v2103
          %vm2115 = vcmp.eq.f32.partialorder %v2114, 8.507059e+37
          %v2116 = vand.u32 %v2103, 2147483648
          %v2117 = vor.u32 1.1754944e-38, %v2116
          %v2118 = vsel %vm2115, %v2117, %v2113
          %v2119 = vmul.f32 1.0, %v2118
          %v2120 = vrcp.pop %v2104
          %v2121 = vmul.f32 %v2104, %v2120
          %v2122 = vsub.f32 1.0, %v2121
          %v2123 = vmul.f32 %v2120, %v2122
          %v2124 = vadd.f32 %v2120, %v2123
          %vm2125 = vweird.f32 %v2104
          %vm2126 = vweird.f32 %v2120
          %vm2127 = vmor %vm2125, %vm2126
          %v2128 = vsel %vm2127, %v2120, %v2124
          %v2129 = vand.u32 2147483647, %v2104
          %vm2130 = vcmp.eq.f32.partialorder %v2129, 8.507059e+37
          %v2131 = vand.u32 %v2104, 2147483648
          %v2132 = vor.u32 1.1754944e-38, %v2131
          %v2133 = vsel %vm2130, %v2132, %v2128
          %v2134 = vmul.f32 1.0, %v2133
          %v2135 = vmul.f32 %v2079, %v2051
          %v2136 = vmul.f32 %v2094, %v2053
          %v2137 = vadd.f32 %v2017, %v2135
          %v2138 = vadd.f32 %v2018, %v2136
          %v2139 = vtanh.pop %v2137
          %v2140 = vtanh.pop %v2138
          %v2141 = vsub.f32 1.0, %v2119
          %v2142 = vsub.f32 1.0, %v2134
          %v2143 = vmul.f32 %v2141, %v2139
          %v2144 = vmul.f32 %v2142, %v2140
          %v2145 = vmul.f32 %v2119, %v863
          %v2146 = vmul.f32 %v2134, %v864
          %v2147 = vadd.f32 %v2143, %v2145
          %v2148 = vadd.f32 %v2144, %v2146
          %2149 = vst.msk [vmem:[#allocation3] sm:$0xff] %vm918, %v2147
          %2150 = vst.msk [vmem:[#allocation3 + $0x8] sm:$0xff] %vm918, %v2148
        $region128: #{tpu_custom_call.1} parent=83 // pred_fallthru
          _
        %v2151 = vld [vmem:[#allocation3] sm:$0xff]
        %v2152 = vld [vmem:[#allocation3 + $0x8] sm:$0xff]
        %v2153 = vpack.c.bf16 %v2152, %v2151
        %v2154 = vld [vmem:[%s745] sm:$0xff]
        %v2155 = vld [vmem:[%s745 + $0x8] sm:$0xff]
        %v2156 = vld [vmem:[%s745 + $0x10] sm:$0xff]
        %v2157 = vld [vmem:[%s745 + $0x18] sm:$0xff]
        %v2158 = vld [vmem:[#allocation2] sm:$0xff]
        %v2159 = vld [vmem:[#allocation2 + $0x8] sm:$0xff]
        %v2160 = vpack.c.bf16 %v2159, %v2158
        %v2161 = vld [vmem:[%s755] sm:$0xff]
        %v2162 = vld [vmem:[%s755 + $0x8] sm:$0xff]
        %v2163 = vld [vmem:[%s755 + $0x10] sm:$0xff]
        %v2164 = vld [vmem:[%s755 + $0x18] sm:$0xff]
        %v2165 = vld [vmem:[%s755 + $0x20] sm:$0xff]
        %v2166 = vld [vmem:[%s755 + $0x28] sm:$0xff]
        %v2167 = vld [vmem:[%s755 + $0x30] sm:$0xff]
        %v2168 = vld [vmem:[%s755 + $0x38] sm:$0xff]
        %v2177 = vunpack.c.l.b16 %v2161
        %v2178 = vunpack.c.h.b16 %v2161
        %v2179 = vunpack.c.l.b16 %v2162
        %v2180 = vunpack.c.h.b16 %v2162
        %v2181 = vunpack.c.l.b16 %v2163
        %v2182 = vunpack.c.h.b16 %v2163
        %v2183 = vunpack.c.l.b16 %v2164
        %v2184 = vunpack.c.h.b16 %v2164
        %v2185 = vunpack.c.l.b16 %v2165
        %v2186 = vunpack.c.h.b16 %v2165
        %v2187 = vunpack.c.l.b16 %v2166
        %v2188 = vunpack.c.h.b16 %v2166
        %v2189 = vunpack.c.l.b16 %v2167
        %v2190 = vunpack.c.h.b16 %v2167
        %v2191 = vunpack.c.l.b16 %v2168
        %v2192 = vunpack.c.h.b16 %v2168
        %v2193 = vpack.c.b16 %v2179, %v2177
        %v2194 = vpack.c.b16 %v2180, %v2178
        %v2195 = vpack.c.b16 %v2183, %v2181
        %v2196 = vpack.c.b16 %v2184, %v2182
        %v2197 = vpack.c.b16 %v2187, %v2185
        %v2198 = vpack.c.b16 %v2188, %v2186
        %v2199 = vpack.c.b16 %v2191, %v2189
        %v2200 = vpack.c.b16 %v2192, %v2190
        %vm2209 = vcmask 523264
        %v2211 = vsel %vm2209, %v2160, 0
        %2213 = vmatpush.bf16.msra.mxu0 0
        %2214 = vmatpush.bf16.msra.mxu0 0
        %2215 = vmatpush.bf16.msra.mxu0 0
        %2216 = vmatpush.bf16.msra.mxu0 0
        %2217 = vmatpush.bf16.msra.mxu0 %v2199
        %2218 = vmatpush.bf16.msra.mxu0 %v2197
        %2219 = vmatpush.bf16.msra.mxu0 %v2195
        %2220 = vmatpush.bf16.msra.mxu0 %v2193
        %2221 = vmatmul.bf16.gmra.mxu0 %v2211
        %v2222 = vpop.f32.mrf.mxu0
        %v2223 = vadd.f32 0.0, %v2222
        %v2224 = vpop.f32.mrf.mxu0
        %v2225 = vadd.f32 0.0, %v2224
        %2226 = vdwg.mxu0
        %2227 = vmatpush.bf16.msra.mxu0 0
        %2228 = vmatpush.bf16.msra.mxu0 0
        %2229 = vmatpush.bf16.msra.mxu0 0
        %2230 = vmatpush.bf16.msra.mxu0 0
        %2231 = vmatpush.bf16.msra.mxu0 %v2200
        %2232 = vmatpush.bf16.msra.mxu0 %v2198
        %2233 = vmatpush.bf16.msra.mxu0 %v2196
        %2234 = vmatpush.bf16.msra.mxu0 %v2194
        %2235 = vmatmul.bf16.gmra.mxu0 %v2211
        %v2236 = vpop.f32.mrf.mxu0
        %v2237 = vadd.f32 0.0, %v2236
        %v2238 = vpop.f32.mrf.mxu0
        %v2239 = vadd.f32 0.0, %v2238
        %2240 = vdwg.mxu0
        %v2245 = vunpack.c.l.b16 %v2154
        %v2246 = vunpack.c.h.b16 %v2154
        %v2247 = vunpack.c.l.b16 %v2155
        %v2248 = vunpack.c.h.b16 %v2155
        %v2249 = vunpack.c.l.b16 %v2156
        %v2250 = vunpack.c.h.b16 %v2156
        %v2251 = vunpack.c.l.b16 %v2157
        %v2252 = vunpack.c.h.b16 %v2157
        %v2253 = vpack.c.b16 %v2247, %v2245
        %v2254 = vpack.c.b16 %v2248, %v2246
        %v2255 = vpack.c.b16 %v2251, %v2249
        %v2256 = vpack.c.b16 %v2252, %v2250
        %vm2261 = vcmask 261120
        %v2263 = vsel %vm2261, %v2153, 0
        %2265 = vmatpush.bf16.msra.mxu0 0
        %2266 = vmatpush.bf16.msra.mxu0 0
        %2267 = vmatpush.bf16.msra.mxu0 0
        %2268 = vmatpush.bf16.msra.mxu0 0
        %2269 = vmatpush.bf16.msra.mxu0 0
        %2270 = vmatpush.bf16.msra.mxu0 0
        %2271 = vmatpush.bf16.msra.mxu0 %v2255
        %2272 = vmatpush.bf16.msra.mxu0 %v2253
        %2273 = vmatmul.bf16.gmra.mxu0 %v2263
        %v2274 = vpop.f32.mrf.mxu0
        %v2275 = vadd.f32 %v2223, %v2274
        %v2276 = vpop.f32.mrf.mxu0
        %v2277 = vadd.f32 %v2225, %v2276
        %2278 = vdwg.mxu0
        %2279 = vmatpush.bf16.msra.mxu0 0
        %2280 = vmatpush.bf16.msra.mxu0 0
        %2281 = vmatpush.bf16.msra.mxu0 0
        %2282 = vmatpush.bf16.msra.mxu0 0
        %2283 = vmatpush.bf16.msra.mxu0 0
        %2284 = vmatpush.bf16.msra.mxu0 0
        %2285 = vmatpush.bf16.msra.mxu0 %v2256
        %2286 = vmatpush.bf16.msra.mxu0 %v2254
        %2287 = vmatmul.bf16.gmra.mxu0 %v2263
        %v2288 = vpop.f32.mrf.mxu0
        %v2289 = vadd.f32 %v2237, %v2288
        %v2290 = vpop.f32.mrf.mxu0
        %v2291 = vadd.f32 %v2239, %v2290
        %2292 = vdwg.mxu0
        %v2293 = vld [vmem:[#allocation4] sm:$0xff]
        %v2294 = vld [vmem:[#allocation4 + $0x8] sm:$0xff]
        %v2295 = vpack.c.bf16 %v2294, %v2293
        %v2296 = vld [vmem:[%s765] sm:$0xff]
        %v2297 = vld [vmem:[%s765 + $0x8] sm:$0xff]
        %v2298 = vld [vmem:[%s765 + $0x10] sm:$0xff]
        %v2299 = vld [vmem:[%s765 + $0x18] sm:$0xff]
        %v2304 = vunpack.c.l.b16 %v2296
        %v2305 = vunpack.c.h.b16 %v2296
        %v2306 = vunpack.c.l.b16 %v2297
        %v2307 = vunpack.c.h.b16 %v2297
        %v2308 = vunpack.c.l.b16 %v2298
        %v2309 = vunpack.c.h.b16 %v2298
        %v2310 = vunpack.c.l.b16 %v2299
        %v2311 = vunpack.c.h.b16 %v2299
        %v2312 = vpack.c.b16 %v2306, %v2304
        %v2313 = vpack.c.b16 %v2307, %v2305
        %v2314 = vpack.c.b16 %v2310, %v2308
        %v2315 = vpack.c.b16 %v2311, %v2309
        %v2321 = vsel %vm2261, %v2295, 0
        %2323 = vmatpush.bf16.msra.mxu0 0
        %2324 = vmatpush.bf16.msra.mxu0 0
        %2325 = vmatpush.bf16.msra.mxu0 0
        %2326 = vmatpush.bf16.msra.mxu0 0
        %2327 = vmatpush.bf16.msra.mxu0 0
        %2328 = vmatpush.bf16.msra.mxu0 0
        %2329 = vmatpush.bf16.msra.mxu0 %v2314
        %2330 = vmatpush.bf16.msra.mxu0 %v2312
        %2331 = vmatmul.bf16.gmra.mxu0 %v2321
        %v2332 = vpop.f32.mrf.mxu0
        %v2333 = vadd.f32 0.0, %v2332
        %v2334 = vpop.f32.mrf.mxu0
        %v2335 = vadd.f32 0.0, %v2334
        %2336 = vdwg.mxu0
        %2337 = vmatpush.bf16.msra.mxu0 0
        %2338 = vmatpush.bf16.msra.mxu0 0
        %2339 = vmatpush.bf16.msra.mxu0 0
        %2340 = vmatpush.bf16.msra.mxu0 0
        %2341 = vmatpush.bf16.msra.mxu0 0
        %2342 = vmatpush.bf16.msra.mxu0 0
        %2343 = vmatpush.bf16.msra.mxu0 %v2315
        %2344 = vmatpush.bf16.msra.mxu0 %v2313
        %2345 = vmatmul.bf16.gmra.mxu0 %v2321
        %v2346 = vpop.f32.mrf.mxu0
        %v2347 = vadd.f32 0.0, %v2346
        %v2348 = vpop.f32.mrf.mxu0
        %v2349 = vadd.f32 0.0, %v2348
        %2350 = vdwg.mxu0
        %v2351 = vadd.f32 %v2275, %v2333
        %v2352 = vadd.f32 %v2289, %v2347
        %v2353 = vadd.f32 %v2277, %v2335
        %v2354 = vadd.f32 %v2291, %v2349
        %v2355 = vld [vmem:[%s851] sm:$0x3]
        %v2357 = vperm.slane %v2355, 0
        %v2358 = vperm.slane %v2355, 1
        %v2361 = vadd.f32 %v2351, %v2357
        %v2362 = vadd.f32 %v2352, %v2358
        %v2363 = vadd.f32 %v2353, %v2357
        %v2364 = vadd.f32 %v2354, %v2358
        %2365 = vst [vmem:[%s833] sm:$0xff] %v2361
        %2366 = vst [vmem:[%s833 + $0x8] sm:$0xff] %v2362
        %2367 = vst [vmem:[%s833 + $0x10] sm:$0xff] %v2363
        %2368 = vst [vmem:[%s833 + $0x18] sm:$0xff] %v2364
        %p2369 = scmp.eq.s32.totalorder %s48, 3
        // Predicated region
        $region129: #{tpu_custom_call.1} parent=83 // pred_check
          %p2370 = pneg %p2369
        $region130: #{tpu_custom_call.1} parent=83 // pred_check_branch
          %2372 = sbr.rel (%p2370) target = $region132
        $region131: #{tpu_custom_call.1} parent=83 // pred_region
          %v2373 = vld [vmem:[#allocation3] sm:$0xff]
          %v2374 = vld [vmem:[#allocation3 + $0x8] sm:$0xff]
          %2375 = vst.msk [vmem:[#allocation22] sm:$0xff] %vm2261, %v2373
          %2376 = vst.msk [vmem:[#allocation22 + $0x8] sm:$0xff] %vm2261, %v2374
        $region132: #{tpu_custom_call.1} parent=83 // pred_fallthru
          _
        %s2377 = sand.u32 %s441, 1
        %s2378 = scalar_lea.sflag [#allocation6], %s2377
        %s2379 = sand.u32 %s441, 1
        %s2380 = smul.addr %s2379, 32
        %s2381 = scalar_lea.vmem [#allocation21], %s2380
        // Predicated region
        $region133: #{tpu_custom_call.1} parent=83 // pred_check
          %p2382 = pneg %p451
        $region134: #{tpu_custom_call.1} parent=83 // pred_check_branch
          %2384 = sbr.rel (%p2382) target = $region136
        $region135: #{tpu_custom_call.1} parent=83 // pred_region
          %s2385 = smul.u32 2, %s47
          %s2386 = smul.u32 2, %s48
          %2388 = vsyncadd %s2378, 0
          %s2389 = smul.addr %s2385, 8
          %s2390 = sadd.s32 %s2386, %s2389
          %s2391 = smul.addr %s2390, 8
          %s2392 = scalar_lea.hbm %s16, %s2391
          %s2393 = sshll.u32 %s2381, 4
          %s2394 = int_to_ptr.vmem [resolvable:$true] %s2393
          %s2395 = sshll.u32 %s2392, 4
          %s2396 = int_to_ptr.hbm [resolvable:$true] %s2395
          %2401 = dma.vmem_to_hbm [thread:$0]  %s2394, 512, %s2396, %s2378, 256, 1024, 16
        $region136: #{tpu_custom_call.1} parent=83 // pred_fallthru
          _
        // Predicated region
        $region137: #{tpu_custom_call.1} parent=83 // pred_check
          %p2402 = pneg %p477
        $region138: #{tpu_custom_call.1} parent=83 // pred_check_branch
          %2404 = sbr.rel (%p2402) target = $region140
        $region139: #{tpu_custom_call.1} parent=83 // pred_region
          %s2405 = smul.u32 2, %s47
          %2407 = vsyncadd [#allocation23], 0
          %s2408 = smul.addr %s2405, 8
          %s2409 = scalar_lea.hbm %s17, %s2408
          %s2410 = sshll.u32 [#allocation22], 4
          %s2411 = int_to_ptr.vmem [resolvable:$true] %s2410
          %s2412 = sshll.u32 %s2409, 4
          %s2413 = int_to_ptr.hbm [resolvable:$true] %s2412
          %2418 = dma.vmem_to_hbm [thread:$0]  %s2411, 256, %s2413, [#allocation23], 128, 128, 8
        $region140: #{tpu_custom_call.1} parent=83 // pred_fallthru
          _
        // Predicated region
        $region141: #{tpu_custom_call.1} parent=83 // pred_check
          %p2419 = pneg %p477
        $region142: #{tpu_custom_call.1} parent=83 // pred_check_branch
          %2421 = sbr.rel (%p2419) target = $region144
        $region143: #{tpu_custom_call.1} parent=83 // pred_region
          %2423 = dma.done [#allocation23], 256
        $region144: #{tpu_custom_call.1} parent=83 // pred_fallthru
          _
      $region84: #{tpu_custom_call.1} parent=5 // pred_fallthru
        _
      %p2424 = scmp.le.s32.totalorder 2, %s38
      // Predicated region
      $region145: #{tpu_custom_call.1} parent=5 // pred_check
        %p2425 = pneg %p2424
      $region146: #{tpu_custom_call.1} parent=5 // pred_check_branch
        %2427 = sbr.rel (%p2425) target = $region148
      $region147: #{tpu_custom_call.1} parent=5 // pred_region
        %s2428 = ssub.s32 %s38, 2
        // Predicated region
        $region149: #{tpu_custom_call.1} parent=147 // pred_check
          %p2429 = pneg %p457
        $region150: #{tpu_custom_call.1} parent=147 // pred_check_branch
          %2431 = sbr.rel (%p2429) target = $region152
        $region151: #{tpu_custom_call.1} parent=147 // pred_region
          %s2432 = sand.u32 %s442, 1
          %s2433 = scalar_lea.sflag [#allocation6], %s2432
          %s2434 = sand.u32 %s442, 1
          %s2435 = smul.addr %s2434, 32
          %s2436 = scalar_lea.vmem [#allocation21], %s2435
          %2438 = dma.done %s2433, 512
        $region152: #{tpu_custom_call.1} parent=147 // pred_fallthru
          _
      $region148: #{tpu_custom_call.1} parent=5 // pred_fallthru
        _
    $region6: #{tpu_custom_call.1} parent=1 // loop_footer
      %s42 = sadd.s32 1, %s38
    $region7: #{tpu_custom_call.1} parent=1 // loop_footer_branch
      %37 = sbr.rel target = $region3
    $region8: #{tpu_custom_call.1} parent=1 // loop_exit
      _
    %2439 = vsyncpa [#allocation5], 1
    %s2440 = scalar_lea.sflag [#allocation5], 1
    %2441 = vsyncpa %s2440, 1
    %2442 = vsyncpa [#allocation8], 1
    %2443 = vsyncpa [#allocation11], 1
    %2444 = vsyncpa [#allocation14], 1
    %2445 = vsyncpa [#allocation17], 1
    %s2446 = scalar_lea.sflag [#allocation17], 1
    %2447 = vsyncpa %s2446, 1
    %2448 = vsyncpa [#allocation20], 1
    %s2449 = scalar_lea.sflag [#allocation20], 1
    %2450 = vsyncpa %s2449, 1
    %2451 = vsyncpa [#allocation6], 1
    %s2452 = scalar_lea.sflag [#allocation6], 1
    %2453 = vsyncpa %s2452, 1
    %2454 = vsyncpa [#allocation23], 1

</llo_original>
